<compile_context>
chip_gen: v7x
topology: tpu7x:2x2x1
jax: 0.10.0
libtpu: 0.0.40
codegen_flags: <defaults>
</compile_context>

<pallas_src>
import jax
import jax.numpy as jnp
from jax import lax
from jax.experimental import pallas as pl
from jax.experimental.pallas import tpu as pltpu


def plc_rnn_kernel(x_ref,            # (Bblk, Tt)   input chunk (input_size == 1, squeezed)
                   w0_ref,           # (1, H)       W_ih0^T row
                   whh0_ref,         # (H, H)       W_hh0^T
                   b0_ref,           # (1, H)       b_ih0 + b_hh0 (pre-folded)
                   w1_ref,           # (2H, H)      [W_ih1^T ; W_hh1^T] (pre-stacked)
                   b1_ref,           # (1, H)       b_ih1 + b_hh1 (pre-folded)
                   wfc_ref,          # (1, H)       fc.weight (row layout)
                   bfc_ref,          # (1, 1)       fc.bias
                   out_ref,          # (Bblk, Tt)   lane-dense output chunk
                   h01_scr,          # (Bblk, 2H)   [h0 | h1] carry, persists across T chunks
                   h1_all):          # (Tt, Bblk, H) staging: pre-loop x*w0+b0, post-loop h1
    Bblk, Tt = x_ref.shape
    H = whh0_ref.shape[0]

    # PyTorch forward: h0 = zeros(num_layers, B, H) -> reset at t == 0 of each batch block.
    @pl.when(pl.program_id(1) == 0)
    def _():
        h01_scr[...] = jnp.zeros_like(h01_scr)

    # ---- off the serial path: layer-0 input contribution for the whole chunk ----
    # input_size == 1, so x_t @ W_ih0^T is an outer product; fold b0 in too.
    x_tb = jnp.transpose(x_ref[...])                                  # (Tt, Bblk)
    w0_row = w0_ref[...].reshape(1, 1, H)
    b0_row = b0_ref[...].reshape(1, 1, H)
    h1_all[...] = x_tb[:, :, None] * w0_row + b0_row                  # (Tt, Bblk, H)

    # Hoisted invariant broadcast (JAX does not CSE broadcast_in_dim).
    b1_b = jnp.broadcast_to(b1_ref[...], (Bblk, H))

    def step(t, carry):
        xwb_t = h1_all[t]                                             # (Bblk, H) = x_t*W0 + b0
        h0_prev = h01_scr[:, :H]

        # ---- layer 0 ----
        h0 = jnp.tanh(
            xwb_t
            + jnp.dot(h0_prev, whh0_ref[...], preferred_element_type=jnp.float32))
        h01_scr[:, :H] = h0                                           # left half of carry

        # ---- layer 1: fused K=2H matmul reading [h0_new | h1_prev] in place ----
        h1 = jnp.tanh(
            jnp.dot(h01_scr[...], w1_ref[...], preferred_element_type=jnp.float32)
            + b1_b)
        h01_scr[:, H:2 * H] = h1                                      # right half of carry
        h1_all[t] = h1                                                # stage for deferred FC
        return carry

    lax.fori_loop(0, Tt, step, 0, unroll=min(Tt, 8))

    # ---- deferred FC (output width == 1) ----
    # One broadcast-mul + lane reduce over H, one transpose, one lane-dense (Bblk, Tt) store.
    # TODO(synk): generalize to fc output width > 1 (module spec has input_size == 1).
    w_fc = wfc_ref[...].reshape(1, 1, H)
    y_tb = jnp.sum(h1_all[...] * w_fc, axis=-1) + bfc_ref[...]        # (Tt, Bblk)
    out_ref[...] = jnp.transpose(y_tb).astype(out_ref.dtype)          # (Bblk, Tt)


def _round_up(n, m):
    return ((n + m - 1) // m) * m


def _vmem_limit_bytes(Bblk, Tt, H):
    """Padded-VMEM budget: double-buffered streamed/weight blocks + scratch, capped per chip."""
    f32 = 4
    pad2 = lambda a, b: _round_up(a, 8) * _round_up(b, 128)
    x_blk = 2 * pad2(Bblk, Tt) * f32
    out_blk = 2 * pad2(Bblk, Tt) * f32
    weights = 2 * f32 * (4 * pad2(1, H) + pad2(H, H) + pad2(2 * H, H) + pad2(1, 1))
    scratch = f32 * (pad2(Bblk, 2 * H) + Tt * pad2(Bblk, H))
    need = x_blk + out_blk + weights + scratch
    try:
        cap = int(pltpu.get_tpu_info().vmem_capacity_bytes)
    except Exception:
        cap = 64 << 20                                   # conservative (v7x per-TC)
    return int(min(max(2 * need, 4 << 20), (cap * 3) // 4))


def plc_model_forward(x_bti, params, *, b_chunk=None, t_chunk=None):
    """x_bti: (B, T, input_size) float32, batch-first like the PyTorch module."""
    B, T, I = x_bti.shape
    assert I == 1, "kernel is specialized for input_size == 1"
    H = params["whh0_t"].shape[0]
    Bblk = B if b_chunk is None else b_chunk
    Tt = T if t_chunk is None else t_chunk
    assert B % Bblk == 0 and T % Tt == 0

    x_bt = jnp.reshape(x_bti, (B, T))                    # squeeze unit input dim (free)

    # Fold paired biases and stack layer-1 weights once, outside the kernel.
    b0 = params["bih0"] + params["bhh0"]                                 # (1, H)
    b1 = params["bih1"] + params["bhh1"]                                 # (1, H)
    w1 = jnp.concatenate([params["wih1_t"], params["whh1_t"]], axis=0)   # (2H, H)
    wfc_row = jnp.transpose(params["wfc_t"])                             # (1, H)

    inv = lambda shape: pl.BlockSpec(shape, lambda b, t: (0,) * len(shape))
    grid_spec = pltpu.PrefetchScalarGridSpec(
        num_scalar_prefetch=0,
        grid=(B // Bblk, T // Tt),
        in_specs=[
            pl.BlockSpec((Bblk, Tt), lambda b, t: (b, t)),   # x, streamed along B and T
            inv((1, H)),                                     # w0 row
            inv((H, H)),                                     # whh0
            inv((1, H)),                                     # b0 (folded)
            inv((2 * H, H)),                                 # w1 (stacked)
            inv((1, H)),                                     # b1 (folded)
            inv((1, H)),                                     # wfc row
            inv((1, 1)),                                     # bfc
        ],
        out_specs=pl.BlockSpec((Bblk, Tt), lambda b, t: (b, t)),
        scratch_shapes=[
            pltpu.VMEM((Bblk, 2 * H), jnp.float32),          # [h0 | h1] carry
            pltpu.VMEM((Tt, Bblk, H), jnp.float32),          # staging (x*w0+b0, then h1)
        ],
    )

    out_bt = pl.pallas_call(
        plc_rnn_kernel,
        out_shape=jax.ShapeDtypeStruct((B, T), jnp.float32),
        grid_spec=grid_spec,
        compiler_params=pltpu.CompilerParams(
            # T axis carries the recurrence -> must stay sequential ("arbitrary").
            # B axis is independent -> "parallel" (sharded across TCs on v7x).
            dimension_semantics=("parallel", "arbitrary"),
            vmem_limit_bytes=_vmem_limit_bytes(Bblk, Tt, H),
        ),
    )(x_bt, params["wih0_t"], params["whh0_t"], b0, w1, b1, wfc_row, params["bfc"])

    return out_bt[..., None]                               # (B, T, 1)


def plc_model_ref(x_bti, params):
    """Pure-JAX reference mirroring nn.RNN(tanh, 2 layers) + nn.Linear."""
    B, T, I = x_bti.shape
    H = params["whh0_t"].shape[0]
    h0 = jnp.zeros((B, H), jnp.float32)
    h1 = jnp.zeros((B, H), jnp.float32)
    outs = []
    for t in range(T):
        xt = x_bti[:, t, :]
        h0 = jnp.tanh(xt @ params["wih0_t"] + params["bih0"]
                      + h0 @ params["whh0_t"] + params["bhh0"])
        h1 = jnp.tanh(h0 @ params["wih1_t"] + params["bih1"]
                      + h1 @ params["whh1_t"] + params["bhh1"])
        outs.append(h1 @ params["wfc_t"] + params["bfc"])
    return jnp.stack(outs, axis=1)                         # (B, T, 1)


def init_params(key, input_size, hidden_size):
    """Deterministic init matching PyTorch shapes; weights pre-transposed for the kernel."""
    ks = jax.random.split(key, 11)
    k_rnn = 1.0 / jnp.sqrt(hidden_size)
    k_fc = 1.0 / jnp.sqrt(hidden_size)
    u = lambda k, shape, scale: jax.random.uniform(
        k, shape, jnp.float32, minval=-scale, maxval=scale)
    return {
        # layer 0: W_ih (H, I) stored transposed (I, H); W_hh (H, H) stored transposed
        "wih0_t": u(ks[0], (input_size, hidden_size), k_rnn),
        "whh0_t": u(ks[1], (hidden_size, hidden_size), k_rnn),
        "bih0":   u(ks[2], (1, hidden_size), k_rnn),
        "bhh0":   u(ks[3], (1, hidden_size), k_rnn),
        # layer 1
        "wih1_t": u(ks[4], (hidden_size, hidden_size), k_rnn),
        "whh1_t": u(ks[5], (hidden_size, hidden_size), k_rnn),
        "bih1":   u(ks[6], (1, hidden_size), k_rnn),
        "bhh1":   u(ks[7], (1, hidden_size), k_rnn),
        # fc: weight (1, H) stored transposed (H, 1); bias (1,) -> (1, 1)
        "wfc_t":  u(ks[8], (hidden_size, input_size), k_fc),
        "bfc":    u(ks[9], (1, input_size), k_fc),
    }


if __name__ == "__main__":
    input_size = 1
    hidden_size = 128
    B, T = 2, 8

    key = jax.random.PRNGKey(0)
    k_x, k_p = jax.random.split(key)
    x = jax.random.normal(k_x, (B, T, input_size), jnp.float32)
    params = init_params(k_p, input_size, hidden_size)

    out = jax.block_until_ready(plc_model_forward(x, params))
    ref = jax.block_until_ready(plc_model_ref(x, params))

    assert out.shape == (B, T, input_size), out.shape
    assert jnp.allclose(out, ref, atol=1e-4, rtol=1e-4), float(jnp.max(jnp.abs(out - ref)))
    print("KERNEL_OK")
</pallas_src>

<mosaic_0001>
module attributes {stable_mosaic.version = 11 : i64} {
  func.func @plc_rnn_kernel(%arg0: i32, %arg1: i32, %arg2: memref<2x8xf32, #tpu.memory_space<vmem>>, %arg3: memref<1x128xf32, #tpu.memory_space<vmem>>, %arg4: memref<128x128xf32, #tpu.memory_space<vmem>>, %arg5: memref<1x128xf32, #tpu.memory_space<vmem>>, %arg6: memref<256x128xf32, #tpu.memory_space<vmem>>, %arg7: memref<1x128xf32, #tpu.memory_space<vmem>>, %arg8: memref<1x128xf32, #tpu.memory_space<vmem>>, %arg9: memref<1x1xf32, #tpu.memory_space<vmem>>, %arg10: memref<2x8xf32, #tpu.memory_space<vmem>>, %arg11: memref<2x256xf32, #tpu.memory_space<vmem>>, %arg12: memref<8x2x128xf32, #tpu.memory_space<vmem>>) attributes {dimension_semantics = [#tpu.dimension_semantics<parallel>, #tpu.dimension_semantics<arbitrary>], iteration_bounds = array<i64: 1, 1>, scalar_prefetch = 0 : i64, scratch_operands = 2 : i64, tpu.core_type = #tpu.core_type<tc>, window_params = [{transform_indices = @transform_0, window_bounds = array<i64: 2, 8>}, {pipeline_mode = #tpu.pipeline_mode<synchronous>, transform_indices = @transform_1, window_bounds = array<i64: 1, 128>}, {pipeline_mode = #tpu.pipeline_mode<synchronous>, transform_indices = @transform_2, window_bounds = array<i64: 128, 128>}, {pipeline_mode = #tpu.pipeline_mode<synchronous>, transform_indices = @transform_3, window_bounds = array<i64: 1, 128>}, {pipeline_mode = #tpu.pipeline_mode<synchronous>, transform_indices = @transform_4, window_bounds = array<i64: 256, 128>}, {pipeline_mode = #tpu.pipeline_mode<synchronous>, transform_indices = @transform_5, window_bounds = array<i64: 1, 128>}, {pipeline_mode = #tpu.pipeline_mode<synchronous>, transform_indices = @transform_6, window_bounds = array<i64: 1, 128>}, {pipeline_mode = #tpu.pipeline_mode<synchronous>, transform_indices = @transform_7, window_bounds = array<i64: 1, 1>}, {transform_indices = @transform_8, window_bounds = array<i64: 2, 8>}]} {
    %c0_i32 = arith.constant 0 : i32
    %0 = arith.cmpi eq, %arg1, %c0_i32 : i32
    %1 = arith.extui %0 : i1 to i32
    %c0_i32_0 = arith.constant 0 : i32
    %2 = arith.cmpi ne, %1, %c0_i32_0 : i32
    scf.if %2 {
      %cst_164 = arith.constant 0.000000e+00 : f32
      %182 = vector.broadcast %cst_164 : f32 to vector<2x256xf32>
      %c0_165 = arith.constant 0 : index
      %c0_166 = arith.constant 0 : index
      %183 = vector.load %arg11[%c0_165, %c0_166] : memref<2x256xf32, #tpu.memory_space<vmem>>, vector<2x256xf32>
      tpu.vector_store %arg11[%c0_165, %c0_166], %182 {strides = array<i32>} : memref<2x256xf32, #tpu.memory_space<vmem>>, vector<2x256xf32>,
    } else {
    }
    %c0 = arith.constant 0 : index
    %c0_1 = arith.constant 0 : index
    %3 = vector.load %arg2[%c0, %c0_1] : memref<2x8xf32, #tpu.memory_space<vmem>>, vector<2x8xf32>
    %4 = tpu.transpose %3, [1, 0] : vector<2x8xf32> -> vector<8x2xf32>
    %c0_2 = arith.constant 0 : index
    %c0_3 = arith.constant 0 : index
    %5 = vector.load %arg3[%c0_2, %c0_3] : memref<1x128xf32, #tpu.memory_space<vmem>>, vector<1x128xf32>
    %6 = vector.shape_cast %5 : vector<1x128xf32> to vector<1x1x128xf32>
    %c0_4 = arith.constant 0 : index
    %c0_5 = arith.constant 0 : index
    %7 = vector.load %arg5[%c0_4, %c0_5] : memref<1x128xf32, #tpu.memory_space<vmem>>, vector<1x128xf32>
    %8 = vector.shape_cast %7 : vector<1x128xf32> to vector<1x1x128xf32>
    %9 = vector.shape_cast %4 : vector<8x2xf32> to vector<8x2x1xf32>
    %10 = vector.broadcast %9 : vector<8x2x1xf32> to vector<8x2x128xf32>
    %11 = vector.broadcast %6 : vector<1x1x128xf32> to vector<8x2x128xf32>
    %12 = arith.mulf %10, %11 : vector<8x2x128xf32>
    %13 = vector.broadcast %8 : vector<1x1x128xf32> to vector<8x2x128xf32>
    %14 = arith.addf %12, %13 : vector<8x2x128xf32>
    %c0_6 = arith.constant 0 : index
    %c0_7 = arith.constant 0 : index
    %c0_8 = arith.constant 0 : index
    %15 = vector.load %arg12[%c0_6, %c0_7, %c0_8] : memref<8x2x128xf32, #tpu.memory_space<vmem>>, vector<8x2x128xf32>
    tpu.vector_store %arg12[%c0_6, %c0_7, %c0_8], %14 {strides = array<i32>} : memref<8x2x128xf32, #tpu.memory_space<vmem>>, vector<8x2x128xf32>,
    %c0_9 = arith.constant 0 : index
    %c0_10 = arith.constant 0 : index
    %16 = vector.load %arg7[%c0_9, %c0_10] : memref<1x128xf32, #tpu.memory_space<vmem>>, vector<1x128xf32>
    %17 = vector.shape_cast %16 : vector<1x128xf32> to vector<1x128xf32>
    %18 = vector.broadcast %17 : vector<1x128xf32> to vector<2x128xf32>
    %c0_i32_11 = arith.constant 0 : i32
    %19 = arith.index_cast %c0_i32_11 : i32 to index
    %c0_12 = arith.constant 0 : index
    %c0_13 = arith.constant 0 : index
    %20 = vector.load %arg12[%19, %c0_12, %c0_13] : memref<8x2x128xf32, #tpu.memory_space<vmem>>, vector<1x2x128xf32>
    %21 = vector.shape_cast %20 : vector<1x2x128xf32> to vector<2x128xf32>
    %c0_14 = arith.constant 0 : index
    %c0_15 = arith.constant 0 : index
    %22 = vector.load %arg11[%c0_14, %c0_15] : memref<2x256xf32, #tpu.memory_space<vmem>>, vector<2x128xf32>
    %c0_16 = arith.constant 0 : index
    %c0_17 = arith.constant 0 : index
    %23 = vector.load %arg4[%c0_16, %c0_17] : memref<128x128xf32, #tpu.memory_space<vmem>>, vector<128x128xf32>
    %cst = arith.constant dense<0.000000e+00> : vector<2x128xf32>
    %24 = tpu.matmul %22, %23, %cst {dimension_numbers = #tpu.dot_dimension_numbers<[1], [0], [0], [1], [0, 0, 1, 1], [], []>} : vector<2x128xf32>, vector<128x128xf32>, vector<2x128xf32> -> vector<2x128xf32>
    %25 = arith.addf %21, %24 : vector<2x128xf32>
    %26 = math.tanh %25 : vector<2x128xf32>
    %c0_18 = arith.constant 0 : index
    %c0_19 = arith.constant 0 : index
    %27 = vector.load %arg11[%c0_18, %c0_19] : memref<2x256xf32, #tpu.memory_space<vmem>>, vector<2x128xf32>
    tpu.vector_store %arg11[%c0_18, %c0_19], %26 {strides = array<i32>} : memref<2x256xf32, #tpu.memory_space<vmem>>, vector<2x128xf32>,
    %c0_20 = arith.constant 0 : index
    %c0_21 = arith.constant 0 : index
    %28 = vector.load %arg11[%c0_20, %c0_21] : memref<2x256xf32, #tpu.memory_space<vmem>>, vector<2x256xf32>
    %c0_22 = arith.constant 0 : index
    %c0_23 = arith.constant 0 : index
    %29 = vector.load %arg6[%c0_22, %c0_23] : memref<256x128xf32, #tpu.memory_space<vmem>>, vector<256x128xf32>
    %cst_24 = arith.constant dense<0.000000e+00> : vector<2x128xf32>
    %30 = tpu.matmul %28, %29, %cst_24 {dimension_numbers = #tpu.dot_dimension_numbers<[1], [0], [0], [1], [0, 0, 1, 1], [], []>} : vector<2x256xf32>, vector<256x128xf32>, vector<2x128xf32> -> vector<2x128xf32>
    %31 = arith.addf %30, %18 : vector<2x128xf32>
    %32 = math.tanh %31 : vector<2x128xf32>
    %c0_25 = arith.constant 0 : index
    %c128 = arith.constant 128 : index
    %33 = vector.load %arg11[%c0_25, %c128] : memref<2x256xf32, #tpu.memory_space<vmem>>, vector<2x128xf32>
    tpu.vector_store %arg11[%c0_25, %c128], %32 {strides = array<i32>} : memref<2x256xf32, #tpu.memory_space<vmem>>, vector<2x128xf32>,
    %34 = arith.index_cast %c0_i32_11 : i32 to index
    %c0_26 = arith.constant 0 : index
    %c0_27 = arith.constant 0 : index
    %35 = vector.load %arg12[%34, %c0_26, %c0_27] : memref<8x2x128xf32, #tpu.memory_space<vmem>>, vector<1x2x128xf32>
    %36 = vector.shape_cast %35 : vector<1x2x128xf32> to vector<2x128xf32>
    %37 = vector.shape_cast %32 : vector<2x128xf32> to vector<1x2x128xf32>
    tpu.vector_store %arg12[%34, %c0_26, %c0_27], %37 {strides = array<i32>} : memref<8x2x128xf32, #tpu.memory_space<vmem>>, vector<1x2x128xf32>,
    %c1_i32 = arith.constant 1 : i32
    %38 = arith.index_cast %c1_i32 : i32 to index
    %c0_28 = arith.constant 0 : index
    %c0_29 = arith.constant 0 : index
    %39 = vector.load %arg12[%38, %c0_28, %c0_29] : memref<8x2x128xf32, #tpu.memory_space<vmem>>, vector<1x2x128xf32>
    %40 = vector.shape_cast %39 : vector<1x2x128xf32> to vector<2x128xf32>
    %c0_30 = arith.constant 0 : index
    %c0_31 = arith.constant 0 : index
    %41 = vector.load %arg11[%c0_30, %c0_31] : memref<2x256xf32, #tpu.memory_space<vmem>>, vector<2x128xf32>
    %c0_32 = arith.constant 0 : index
    %c0_33 = arith.constant 0 : index
    %42 = vector.load %arg4[%c0_32, %c0_33] : memref<128x128xf32, #tpu.memory_space<vmem>>, vector<128x128xf32>
    %cst_34 = arith.constant dense<0.000000e+00> : vector<2x128xf32>
    %43 = tpu.matmul %41, %42, %cst_34 {dimension_numbers = #tpu.dot_dimension_numbers<[1], [0], [0], [1], [0, 0, 1, 1], [], []>} : vector<2x128xf32>, vector<128x128xf32>, vector<2x128xf32> -> vector<2x128xf32>
    %44 = arith.addf %40, %43 : vector<2x128xf32>
    %45 = math.tanh %44 : vector<2x128xf32>
    %c0_35 = arith.constant 0 : index
    %c0_36 = arith.constant 0 : index
    %46 = vector.load %arg11[%c0_35, %c0_36] : memref<2x256xf32, #tpu.memory_space<vmem>>, vector<2x128xf32>
    tpu.vector_store %arg11[%c0_35, %c0_36], %45 {strides = array<i32>} : memref<2x256xf32, #tpu.memory_space<vmem>>, vector<2x128xf32>,
    %c0_37 = arith.constant 0 : index
    %c0_38 = arith.constant 0 : index
    %47 = vector.load %arg11[%c0_37, %c0_38] : memref<2x256xf32, #tpu.memory_space<vmem>>, vector<2x256xf32>
    %c0_39 = arith.constant 0 : index
    %c0_40 = arith.constant 0 : index
    %48 = vector.load %arg6[%c0_39, %c0_40] : memref<256x128xf32, #tpu.memory_space<vmem>>, vector<256x128xf32>
    %cst_41 = arith.constant dense<0.000000e+00> : vector<2x128xf32>
    %49 = tpu.matmul %47, %48, %cst_41 {dimension_numbers = #tpu.dot_dimension_numbers<[1], [0], [0], [1], [0, 0, 1, 1], [], []>} : vector<2x256xf32>, vector<256x128xf32>, vector<2x128xf32> -> vector<2x128xf32>
    %50 = arith.addf %49, %18 : vector<2x128xf32>
    %51 = math.tanh %50 : vector<2x128xf32>
    %c0_42 = arith.constant 0 : index
    %c128_43 = arith.constant 128 : index
    %52 = vector.load %arg11[%c0_42, %c128_43] : memref<2x256xf32, #tpu.memory_space<vmem>>, vector<2x128xf32>
    tpu.vector_store %arg11[%c0_42, %c128_43], %51 {strides = array<i32>} : memref<2x256xf32, #tpu.memory_space<vmem>>, vector<2x128xf32>,
    %53 = arith.index_cast %c1_i32 : i32 to index
    %c0_44 = arith.constant 0 : index
    %c0_45 = arith.constant 0 : index
    %54 = vector.load %arg12[%53, %c0_44, %c0_45] : memref<8x2x128xf32, #tpu.memory_space<vmem>>, vector<1x2x128xf32>
    %55 = vector.shape_cast %54 : vector<1x2x128xf32> to vector<2x128xf32>
    %56 = vector.shape_cast %51 : vector<2x128xf32> to vector<1x2x128xf32>
    tpu.vector_store %arg12[%53, %c0_44, %c0_45], %56 {strides = array<i32>} : memref<8x2x128xf32, #tpu.memory_space<vmem>>, vector<1x2x128xf32>,
    %c2_i32 = arith.constant 2 : i32
    %57 = arith.index_cast %c2_i32 : i32 to index
    %c0_46 = arith.constant 0 : index
    %c0_47 = arith.constant 0 : index
    %58 = vector.load %arg12[%57, %c0_46, %c0_47] : memref<8x2x128xf32, #tpu.memory_space<vmem>>, vector<1x2x128xf32>
    %59 = vector.shape_cast %58 : vector<1x2x128xf32> to vector<2x128xf32>
    %c0_48 = arith.constant 0 : index
    %c0_49 = arith.constant 0 : index
    %60 = vector.load %arg11[%c0_48, %c0_49] : memref<2x256xf32, #tpu.memory_space<vmem>>, vector<2x128xf32>
    %c0_50 = arith.constant 0 : index
    %c0_51 = arith.constant 0 : index
    %61 = vector.load %arg4[%c0_50, %c0_51] : memref<128x128xf32, #tpu.memory_space<vmem>>, vector<128x128xf32>
    %cst_52 = arith.constant dense<0.000000e+00> : vector<2x128xf32>
    %62 = tpu.matmul %60, %61, %cst_52 {dimension_numbers = #tpu.dot_dimension_numbers<[1], [0], [0], [1], [0, 0, 1, 1], [], []>} : vector<2x128xf32>, vector<128x128xf32>, vector<2x128xf32> -> vector<2x128xf32>
    %63 = arith.addf %59, %62 : vector<2x128xf32>
    %64 = math.tanh %63 : vector<2x128xf32>
    %c0_53 = arith.constant 0 : index
    %c0_54 = arith.constant 0 : index
    %65 = vector.load %arg11[%c0_53, %c0_54] : memref<2x256xf32, #tpu.memory_space<vmem>>, vector<2x128xf32>
    tpu.vector_store %arg11[%c0_53, %c0_54], %64 {strides = array<i32>} : memref<2x256xf32, #tpu.memory_space<vmem>>, vector<2x128xf32>,
    %c0_55 = arith.constant 0 : index
    %c0_56 = arith.constant 0 : index
    %66 = vector.load %arg11[%c0_55, %c0_56] : memref<2x256xf32, #tpu.memory_space<vmem>>, vector<2x256xf32>
    %c0_57 = arith.constant 0 : index
    %c0_58 = arith.constant 0 : index
    %67 = vector.load %arg6[%c0_57, %c0_58] : memref<256x128xf32, #tpu.memory_space<vmem>>, vector<256x128xf32>
    %cst_59 = arith.constant dense<0.000000e+00> : vector<2x128xf32>
    %68 = tpu.matmul %66, %67, %cst_59 {dimension_numbers = #tpu.dot_dimension_numbers<[1], [0], [0], [1], [0, 0, 1, 1], [], []>} : vector<2x256xf32>, vector<256x128xf32>, vector<2x128xf32> -> vector<2x128xf32>
    %69 = arith.addf %68, %18 : vector<2x128xf32>
    %70 = math.tanh %69 : vector<2x128xf32>
    %c0_60 = arith.constant 0 : index
    %c128_61 = arith.constant 128 : index
    %71 = vector.load %arg11[%c0_60, %c128_61] : memref<2x256xf32, #tpu.memory_space<vmem>>, vector<2x128xf32>
    tpu.vector_store %arg11[%c0_60, %c128_61], %70 {strides = array<i32>} : memref<2x256xf32, #tpu.memory_space<vmem>>, vector<2x128xf32>,
    %72 = arith.index_cast %c2_i32 : i32 to index
    %c0_62 = arith.constant 0 : index
    %c0_63 = arith.constant 0 : index
    %73 = vector.load %arg12[%72, %c0_62, %c0_63] : memref<8x2x128xf32, #tpu.memory_space<vmem>>, vector<1x2x128xf32>
    %74 = vector.shape_cast %73 : vector<1x2x128xf32> to vector<2x128xf32>
    %75 = vector.shape_cast %70 : vector<2x128xf32> to vector<1x2x128xf32>
    tpu.vector_store %arg12[%72, %c0_62, %c0_63], %75 {strides = array<i32>} : memref<8x2x128xf32, #tpu.memory_space<vmem>>, vector<1x2x128xf32>,
    %c3_i32 = arith.constant 3 : i32
    %76 = arith.index_cast %c3_i32 : i32 to index
    %c0_64 = arith.constant 0 : index
    %c0_65 = arith.constant 0 : index
    %77 = vector.load %arg12[%76, %c0_64, %c0_65] : memref<8x2x128xf32, #tpu.memory_space<vmem>>, vector<1x2x128xf32>
    %78 = vector.shape_cast %77 : vector<1x2x128xf32> to vector<2x128xf32>
    %c0_66 = arith.constant 0 : index
    %c0_67 = arith.constant 0 : index
    %79 = vector.load %arg11[%c0_66, %c0_67] : memref<2x256xf32, #tpu.memory_space<vmem>>, vector<2x128xf32>
    %c0_68 = arith.constant 0 : index
    %c0_69 = arith.constant 0 : index
    %80 = vector.load %arg4[%c0_68, %c0_69] : memref<128x128xf32, #tpu.memory_space<vmem>>, vector<128x128xf32>
    %cst_70 = arith.constant dense<0.000000e+00> : vector<2x128xf32>
    %81 = tpu.matmul %79, %80, %cst_70 {dimension_numbers = #tpu.dot_dimension_numbers<[1], [0], [0], [1], [0, 0, 1, 1], [], []>} : vector<2x128xf32>, vector<128x128xf32>, vector<2x128xf32> -> vector<2x128xf32>
    %82 = arith.addf %78, %81 : vector<2x128xf32>
    %83 = math.tanh %82 : vector<2x128xf32>
    %c0_71 = arith.constant 0 : index
    %c0_72 = arith.constant 0 : index
    %84 = vector.load %arg11[%c0_71, %c0_72] : memref<2x256xf32, #tpu.memory_space<vmem>>, vector<2x128xf32>
    tpu.vector_store %arg11[%c0_71, %c0_72], %83 {strides = array<i32>} : memref<2x256xf32, #tpu.memory_space<vmem>>, vector<2x128xf32>,
    %c0_73 = arith.constant 0 : index
    %c0_74 = arith.constant 0 : index
    %85 = vector.load %arg11[%c0_73, %c0_74] : memref<2x256xf32, #tpu.memory_space<vmem>>, vector<2x256xf32>
    %c0_75 = arith.constant 0 : index
    %c0_76 = arith.constant 0 : index
    %86 = vector.load %arg6[%c0_75, %c0_76] : memref<256x128xf32, #tpu.memory_space<vmem>>, vector<256x128xf32>
    %cst_77 = arith.constant dense<0.000000e+00> : vector<2x128xf32>
    %87 = tpu.matmul %85, %86, %cst_77 {dimension_numbers = #tpu.dot_dimension_numbers<[1], [0], [0], [1], [0, 0, 1, 1], [], []>} : vector<2x256xf32>, vector<256x128xf32>, vector<2x128xf32> -> vector<2x128xf32>
    %88 = arith.addf %87, %18 : vector<2x128xf32>
    %89 = math.tanh %88 : vector<2x128xf32>
    %c0_78 = arith.constant 0 : index
    %c128_79 = arith.constant 128 : index
    %90 = vector.load %arg11[%c0_78, %c128_79] : memref<2x256xf32, #tpu.memory_space<vmem>>, vector<2x128xf32>
    tpu.vector_store %arg11[%c0_78, %c128_79], %89 {strides = array<i32>} : memref<2x256xf32, #tpu.memory_space<vmem>>, vector<2x128xf32>,
    %91 = arith.index_cast %c3_i32 : i32 to index
    %c0_80 = arith.constant 0 : index
    %c0_81 = arith.constant 0 : index
    %92 = vector.load %arg12[%91, %c0_80, %c0_81] : memref<8x2x128xf32, #tpu.memory_space<vmem>>, vector<1x2x128xf32>
    %93 = vector.shape_cast %92 : vector<1x2x128xf32> to vector<2x128xf32>
    %94 = vector.shape_cast %89 : vector<2x128xf32> to vector<1x2x128xf32>
    tpu.vector_store %arg12[%91, %c0_80, %c0_81], %94 {strides = array<i32>} : memref<8x2x128xf32, #tpu.memory_space<vmem>>, vector<1x2x128xf32>,
    %c4_i32 = arith.constant 4 : i32
    %95 = arith.index_cast %c4_i32 : i32 to index
    %c0_82 = arith.constant 0 : index
    %c0_83 = arith.constant 0 : index
    %96 = vector.load %arg12[%95, %c0_82, %c0_83] : memref<8x2x128xf32, #tpu.memory_space<vmem>>, vector<1x2x128xf32>
    %97 = vector.shape_cast %96 : vector<1x2x128xf32> to vector<2x128xf32>
    %c0_84 = arith.constant 0 : index
    %c0_85 = arith.constant 0 : index
    %98 = vector.load %arg11[%c0_84, %c0_85] : memref<2x256xf32, #tpu.memory_space<vmem>>, vector<2x128xf32>
    %c0_86 = arith.constant 0 : index
    %c0_87 = arith.constant 0 : index
    %99 = vector.load %arg4[%c0_86, %c0_87] : memref<128x128xf32, #tpu.memory_space<vmem>>, vector<128x128xf32>
    %cst_88 = arith.constant dense<0.000000e+00> : vector<2x128xf32>
    %100 = tpu.matmul %98, %99, %cst_88 {dimension_numbers = #tpu.dot_dimension_numbers<[1], [0], [0], [1], [0, 0, 1, 1], [], []>} : vector<2x128xf32>, vector<128x128xf32>, vector<2x128xf32> -> vector<2x128xf32>
    %101 = arith.addf %97, %100 : vector<2x128xf32>
    %102 = math.tanh %101 : vector<2x128xf32>
    %c0_89 = arith.constant 0 : index
    %c0_90 = arith.constant 0 : index
    %103 = vector.load %arg11[%c0_89, %c0_90] : memref<2x256xf32, #tpu.memory_space<vmem>>, vector<2x128xf32>
    tpu.vector_store %arg11[%c0_89, %c0_90], %102 {strides = array<i32>} : memref<2x256xf32, #tpu.memory_space<vmem>>, vector<2x128xf32>,
    %c0_91 = arith.constant 0 : index
    %c0_92 = arith.constant 0 : index
    %104 = vector.load %arg11[%c0_91, %c0_92] : memref<2x256xf32, #tpu.memory_space<vmem>>, vector<2x256xf32>
    %c0_93 = arith.constant 0 : index
    %c0_94 = arith.constant 0 : index
    %105 = vector.load %arg6[%c0_93, %c0_94] : memref<256x128xf32, #tpu.memory_space<vmem>>, vector<256x128xf32>
    %cst_95 = arith.constant dense<0.000000e+00> : vector<2x128xf32>
    %106 = tpu.matmul %104, %105, %cst_95 {dimension_numbers = #tpu.dot_dimension_numbers<[1], [0], [0], [1], [0, 0, 1, 1], [], []>} : vector<2x256xf32>, vector<256x128xf32>, vector<2x128xf32> -> vector<2x128xf32>
    %107 = arith.addf %106, %18 : vector<2x128xf32>
    %108 = math.tanh %107 : vector<2x128xf32>
    %c0_96 = arith.constant 0 : index
    %c128_97 = arith.constant 128 : index
    %109 = vector.load %arg11[%c0_96, %c128_97] : memref<2x256xf32, #tpu.memory_space<vmem>>, vector<2x128xf32>
    tpu.vector_store %arg11[%c0_96, %c128_97], %108 {strides = array<i32>} : memref<2x256xf32, #tpu.memory_space<vmem>>, vector<2x128xf32>,
    %110 = arith.index_cast %c4_i32 : i32 to index
    %c0_98 = arith.constant 0 : index
    %c0_99 = arith.constant 0 : index
    %111 = vector.load %arg12[%110, %c0_98, %c0_99] : memref<8x2x128xf32, #tpu.memory_space<vmem>>, vector<1x2x128xf32>
    %112 = vector.shape_cast %111 : vector<1x2x128xf32> to vector<2x128xf32>
    %113 = vector.shape_cast %108 : vector<2x128xf32> to vector<1x2x128xf32>
    tpu.vector_store %arg12[%110, %c0_98, %c0_99], %113 {strides = array<i32>} : memref<8x2x128xf32, #tpu.memory_space<vmem>>, vector<1x2x128xf32>,
    %c5_i32 = arith.constant 5 : i32
    %114 = arith.index_cast %c5_i32 : i32 to index
    %c0_100 = arith.constant 0 : index
    %c0_101 = arith.constant 0 : index
    %115 = vector.load %arg12[%114, %c0_100, %c0_101] : memref<8x2x128xf32, #tpu.memory_space<vmem>>, vector<1x2x128xf32>
    %116 = vector.shape_cast %115 : vector<1x2x128xf32> to vector<2x128xf32>
    %c0_102 = arith.constant 0 : index
    %c0_103 = arith.constant 0 : index
    %117 = vector.load %arg11[%c0_102, %c0_103] : memref<2x256xf32, #tpu.memory_space<vmem>>, vector<2x128xf32>
    %c0_104 = arith.constant 0 : index
    %c0_105 = arith.constant 0 : index
    %118 = vector.load %arg4[%c0_104, %c0_105] : memref<128x128xf32, #tpu.memory_space<vmem>>, vector<128x128xf32>
    %cst_106 = arith.constant dense<0.000000e+00> : vector<2x128xf32>
    %119 = tpu.matmul %117, %118, %cst_106 {dimension_numbers = #tpu.dot_dimension_numbers<[1], [0], [0], [1], [0, 0, 1, 1], [], []>} : vector<2x128xf32>, vector<128x128xf32>, vector<2x128xf32> -> vector<2x128xf32>
    %120 = arith.addf %116, %119 : vector<2x128xf32>
    %121 = math.tanh %120 : vector<2x128xf32>
    %c0_107 = arith.constant 0 : index
    %c0_108 = arith.constant 0 : index
    %122 = vector.load %arg11[%c0_107, %c0_108] : memref<2x256xf32, #tpu.memory_space<vmem>>, vector<2x128xf32>
    tpu.vector_store %arg11[%c0_107, %c0_108], %121 {strides = array<i32>} : memref<2x256xf32, #tpu.memory_space<vmem>>, vector<2x128xf32>,
    %c0_109 = arith.constant 0 : index
    %c0_110 = arith.constant 0 : index
    %123 = vector.load %arg11[%c0_109, %c0_110] : memref<2x256xf32, #tpu.memory_space<vmem>>, vector<2x256xf32>
    %c0_111 = arith.constant 0 : index
    %c0_112 = arith.constant 0 : index
    %124 = vector.load %arg6[%c0_111, %c0_112] : memref<256x128xf32, #tpu.memory_space<vmem>>, vector<256x128xf32>
    %cst_113 = arith.constant dense<0.000000e+00> : vector<2x128xf32>
    %125 = tpu.matmul %123, %124, %cst_113 {dimension_numbers = #tpu.dot_dimension_numbers<[1], [0], [0], [1], [0, 0, 1, 1], [], []>} : vector<2x256xf32>, vector<256x128xf32>, vector<2x128xf32> -> vector<2x128xf32>
    %126 = arith.addf %125, %18 : vector<2x128xf32>
    %127 = math.tanh %126 : vector<2x128xf32>
    %c0_114 = arith.constant 0 : index
    %c128_115 = arith.constant 128 : index
    %128 = vector.load %arg11[%c0_114, %c128_115] : memref<2x256xf32, #tpu.memory_space<vmem>>, vector<2x128xf32>
    tpu.vector_store %arg11[%c0_114, %c128_115], %127 {strides = array<i32>} : memref<2x256xf32, #tpu.memory_space<vmem>>, vector<2x128xf32>,
    %129 = arith.index_cast %c5_i32 : i32 to index
    %c0_116 = arith.constant 0 : index
    %c0_117 = arith.constant 0 : index
    %130 = vector.load %arg12[%129, %c0_116, %c0_117] : memref<8x2x128xf32, #tpu.memory_space<vmem>>, vector<1x2x128xf32>
    %131 = vector.shape_cast %130 : vector<1x2x128xf32> to vector<2x128xf32>
    %132 = vector.shape_cast %127 : vector<2x128xf32> to vector<1x2x128xf32>
    tpu.vector_store %arg12[%129, %c0_116, %c0_117], %132 {strides = array<i32>} : memref<8x2x128xf32, #tpu.memory_space<vmem>>, vector<1x2x128xf32>,
    %c6_i32 = arith.constant 6 : i32
    %133 = arith.index_cast %c6_i32 : i32 to index
    %c0_118 = arith.constant 0 : index
    %c0_119 = arith.constant 0 : index
    %134 = vector.load %arg12[%133, %c0_118, %c0_119] : memref<8x2x128xf32, #tpu.memory_space<vmem>>, vector<1x2x128xf32>
    %135 = vector.shape_cast %134 : vector<1x2x128xf32> to vector<2x128xf32>
    %c0_120 = arith.constant 0 : index
    %c0_121 = arith.constant 0 : index
    %136 = vector.load %arg11[%c0_120, %c0_121] : memref<2x256xf32, #tpu.memory_space<vmem>>, vector<2x128xf32>
    %c0_122 = arith.constant 0 : index
    %c0_123 = arith.constant 0 : index
    %137 = vector.load %arg4[%c0_122, %c0_123] : memref<128x128xf32, #tpu.memory_space<vmem>>, vector<128x128xf32>
    %cst_124 = arith.constant dense<0.000000e+00> : vector<2x128xf32>
    %138 = tpu.matmul %136, %137, %cst_124 {dimension_numbers = #tpu.dot_dimension_numbers<[1], [0], [0], [1], [0, 0, 1, 1], [], []>} : vector<2x128xf32>, vector<128x128xf32>, vector<2x128xf32> -> vector<2x128xf32>
    %139 = arith.addf %135, %138 : vector<2x128xf32>
    %140 = math.tanh %139 : vector<2x128xf32>
    %c0_125 = arith.constant 0 : index
    %c0_126 = arith.constant 0 : index
    %141 = vector.load %arg11[%c0_125, %c0_126] : memref<2x256xf32, #tpu.memory_space<vmem>>, vector<2x128xf32>
    tpu.vector_store %arg11[%c0_125, %c0_126], %140 {strides = array<i32>} : memref<2x256xf32, #tpu.memory_space<vmem>>, vector<2x128xf32>,
    %c0_127 = arith.constant 0 : index
    %c0_128 = arith.constant 0 : index
    %142 = vector.load %arg11[%c0_127, %c0_128] : memref<2x256xf32, #tpu.memory_space<vmem>>, vector<2x256xf32>
    %c0_129 = arith.constant 0 : index
    %c0_130 = arith.constant 0 : index
    %143 = vector.load %arg6[%c0_129, %c0_130] : memref<256x128xf32, #tpu.memory_space<vmem>>, vector<256x128xf32>
    %cst_131 = arith.constant dense<0.000000e+00> : vector<2x128xf32>
    %144 = tpu.matmul %142, %143, %cst_131 {dimension_numbers = #tpu.dot_dimension_numbers<[1], [0], [0], [1], [0, 0, 1, 1], [], []>} : vector<2x256xf32>, vector<256x128xf32>, vector<2x128xf32> -> vector<2x128xf32>
    %145 = arith.addf %144, %18 : vector<2x128xf32>
    %146 = math.tanh %145 : vector<2x128xf32>
    %c0_132 = arith.constant 0 : index
    %c128_133 = arith.constant 128 : index
    %147 = vector.load %arg11[%c0_132, %c128_133] : memref<2x256xf32, #tpu.memory_space<vmem>>, vector<2x128xf32>
    tpu.vector_store %arg11[%c0_132, %c128_133], %146 {strides = array<i32>} : memref<2x256xf32, #tpu.memory_space<vmem>>, vector<2x128xf32>,
    %148 = arith.index_cast %c6_i32 : i32 to index
    %c0_134 = arith.constant 0 : index
    %c0_135 = arith.constant 0 : index
    %149 = vector.load %arg12[%148, %c0_134, %c0_135] : memref<8x2x128xf32, #tpu.memory_space<vmem>>, vector<1x2x128xf32>
    %150 = vector.shape_cast %149 : vector<1x2x128xf32> to vector<2x128xf32>
    %151 = vector.shape_cast %146 : vector<2x128xf32> to vector<1x2x128xf32>
    tpu.vector_store %arg12[%148, %c0_134, %c0_135], %151 {strides = array<i32>} : memref<8x2x128xf32, #tpu.memory_space<vmem>>, vector<1x2x128xf32>,
    %c7_i32 = arith.constant 7 : i32
    %152 = arith.index_cast %c7_i32 : i32 to index
    %c0_136 = arith.constant 0 : index
    %c0_137 = arith.constant 0 : index
    %153 = vector.load %arg12[%152, %c0_136, %c0_137] : memref<8x2x128xf32, #tpu.memory_space<vmem>>, vector<1x2x128xf32>
    %154 = vector.shape_cast %153 : vector<1x2x128xf32> to vector<2x128xf32>
    %c0_138 = arith.constant 0 : index
    %c0_139 = arith.constant 0 : index
    %155 = vector.load %arg11[%c0_138, %c0_139] : memref<2x256xf32, #tpu.memory_space<vmem>>, vector<2x128xf32>
    %c0_140 = arith.constant 0 : index
    %c0_141 = arith.constant 0 : index
    %156 = vector.load %arg4[%c0_140, %c0_141] : memref<128x128xf32, #tpu.memory_space<vmem>>, vector<128x128xf32>
    %cst_142 = arith.constant dense<0.000000e+00> : vector<2x128xf32>
    %157 = tpu.matmul %155, %156, %cst_142 {dimension_numbers = #tpu.dot_dimension_numbers<[1], [0], [0], [1], [0, 0, 1, 1], [], []>} : vector<2x128xf32>, vector<128x128xf32>, vector<2x128xf32> -> vector<2x128xf32>
    %158 = arith.addf %154, %157 : vector<2x128xf32>
    %159 = math.tanh %158 : vector<2x128xf32>
    %c0_143 = arith.constant 0 : index
    %c0_144 = arith.constant 0 : index
    %160 = vector.load %arg11[%c0_143, %c0_144] : memref<2x256xf32, #tpu.memory_space<vmem>>, vector<2x128xf32>
    tpu.vector_store %arg11[%c0_143, %c0_144], %159 {strides = array<i32>} : memref<2x256xf32, #tpu.memory_space<vmem>>, vector<2x128xf32>,
    %c0_145 = arith.constant 0 : index
    %c0_146 = arith.constant 0 : index
    %161 = vector.load %arg11[%c0_145, %c0_146] : memref<2x256xf32, #tpu.memory_space<vmem>>, vector<2x256xf32>
    %c0_147 = arith.constant 0 : index
    %c0_148 = arith.constant 0 : index
    %162 = vector.load %arg6[%c0_147, %c0_148] : memref<256x128xf32, #tpu.memory_space<vmem>>, vector<256x128xf32>
    %cst_149 = arith.constant dense<0.000000e+00> : vector<2x128xf32>
    %163 = tpu.matmul %161, %162, %cst_149 {dimension_numbers = #tpu.dot_dimension_numbers<[1], [0], [0], [1], [0, 0, 1, 1], [], []>} : vector<2x256xf32>, vector<256x128xf32>, vector<2x128xf32> -> vector<2x128xf32>
    %164 = arith.addf %163, %18 : vector<2x128xf32>
    %165 = math.tanh %164 : vector<2x128xf32>
    %c0_150 = arith.constant 0 : index
    %c128_151 = arith.constant 128 : index
    %166 = vector.load %arg11[%c0_150, %c128_151] : memref<2x256xf32, #tpu.memory_space<vmem>>, vector<2x128xf32>
    tpu.vector_store %arg11[%c0_150, %c128_151], %165 {strides = array<i32>} : memref<2x256xf32, #tpu.memory_space<vmem>>, vector<2x128xf32>,
    %167 = arith.index_cast %c7_i32 : i32 to index
    %c0_152 = arith.constant 0 : index
    %c0_153 = arith.constant 0 : index
    %168 = vector.load %arg12[%167, %c0_152, %c0_153] : memref<8x2x128xf32, #tpu.memory_space<vmem>>, vector<1x2x128xf32>
    %169 = vector.shape_cast %168 : vector<1x2x128xf32> to vector<2x128xf32>
    %170 = vector.shape_cast %165 : vector<2x128xf32> to vector<1x2x128xf32>
    tpu.vector_store %arg12[%167, %c0_152, %c0_153], %170 {strides = array<i32>} : memref<8x2x128xf32, #tpu.memory_space<vmem>>, vector<1x2x128xf32>,
    %c8_i32 = arith.constant 8 : i32
    %c0_154 = arith.constant 0 : index
    %c0_155 = arith.constant 0 : index
    %171 = vector.load %arg8[%c0_154, %c0_155] : memref<1x128xf32, #tpu.memory_space<vmem>>, vector<1x128xf32>
    %172 = vector.shape_cast %171 : vector<1x128xf32> to vector<1x1x128xf32>
    %c0_156 = arith.constant 0 : index
    %c0_157 = arith.constant 0 : index
    %c0_158 = arith.constant 0 : index
    %173 = vector.load %arg12[%c0_156, %c0_157, %c0_158] : memref<8x2x128xf32, #tpu.memory_space<vmem>>, vector<8x2x128xf32>
    %174 = vector.broadcast %172 : vector<1x1x128xf32> to vector<8x2x128xf32>
    %175 = arith.mulf %173, %174 : vector<8x2x128xf32>
    %cst_159 = arith.constant dense<0.000000e+00> : vector<8x2xf32>
    %176 = vector.multi_reduction <add>, %175, %cst_159 [2] : vector<8x2x128xf32> to vector<8x2xf32>
    %c0_160 = arith.constant 0 : index
    %c0_161 = arith.constant 0 : index
    %177 = vector.load %arg9[%c0_160, %c0_161] : memref<1x1xf32, #tpu.memory_space<vmem>>, vector<1x1xf32>
    %178 = vector.broadcast %177 : vector<1x1xf32> to vector<8x2xf32>
    %179 = arith.addf %176, %178 : vector<8x2xf32>
    %180 = tpu.transpose %179, [1, 0] : vector<8x2xf32> -> vector<2x8xf32>
    %c0_162 = arith.constant 0 : index
    %c0_163 = arith.constant 0 : index
    %181 = vector.load %arg10[%c0_162, %c0_163] : memref<2x8xf32, #tpu.memory_space<vmem>>, vector<2x8xf32>
    tpu.vector_store %arg10[%c0_162, %c0_163], %180 {strides = array<i32>} : memref<2x8xf32, #tpu.memory_space<vmem>>, vector<2x8xf32>,
    return
  }
  func.func @transform_0(%arg0: i32, %arg1: i32) -> (i32, i32) {
    %c0_i32 = arith.constant 0 : i32
    return %arg0, %arg1 : i32, i32
  }
  func.func @transform_1(%arg0: i32, %arg1: i32) -> (i32, i32) {
    %c0_i32 = arith.constant 0 : i32
    %c0_i32_0 = arith.constant 0 : i32
    %c0_i32_1 = arith.constant 0 : i32
    return %c0_i32, %c0_i32_0 : i32, i32
  }
  func.func @transform_2(%arg0: i32, %arg1: i32) -> (i32, i32) {
    %c0_i32 = arith.constant 0 : i32
    %c0_i32_0 = arith.constant 0 : i32
    %c0_i32_1 = arith.constant 0 : i32
    return %c0_i32, %c0_i32_0 : i32, i32
  }
  func.func @transform_3(%arg0: i32, %arg1: i32) -> (i32, i32) {
    %c0_i32 = arith.constant 0 : i32
    %c0_i32_0 = arith.constant 0 : i32
    %c0_i32_1 = arith.constant 0 : i32
    return %c0_i32, %c0_i32_0 : i32, i32
  }
  func.func @transform_4(%arg0: i32, %arg1: i32) -> (i32, i32) {
    %c0_i32 = arith.constant 0 : i32
    %c0_i32_0 = arith.constant 0 : i32
    %c0_i32_1 = arith.constant 0 : i32
    return %c0_i32, %c0_i32_0 : i32, i32
  }
  func.func @transform_5(%arg0: i32, %arg1: i32) -> (i32, i32) {
    %c0_i32 = arith.constant 0 : i32
    %c0_i32_0 = arith.constant 0 : i32
    %c0_i32_1 = arith.constant 0 : i32
    return %c0_i32, %c0_i32_0 : i32, i32
  }
  func.func @transform_6(%arg0: i32, %arg1: i32) -> (i32, i32) {
    %c0_i32 = arith.constant 0 : i32
    %c0_i32_0 = arith.constant 0 : i32
    %c0_i32_1 = arith.constant 0 : i32
    return %c0_i32, %c0_i32_0 : i32, i32
  }
  func.func @transform_7(%arg0: i32, %arg1: i32) -> (i32, i32) {
    %c0_i32 = arith.constant 0 : i32
    %c0_i32_0 = arith.constant 0 : i32
    %c0_i32_1 = arith.constant 0 : i32
    return %c0_i32, %c0_i32_0 : i32, i32
  }
  func.func @transform_8(%arg0: i32, %arg1: i32) -> (i32, i32) {
    %c0_i32 = arith.constant 0 : i32
    return %arg0, %arg1 : i32, i32
  }
}

</mosaic_0001>

<llo_original>
// kernel: tpu_custom_call.1
$region0: #{tpu_custom_call.1}
  #allocation0 [shape = 'u32[]', space=smem, size = 0x4, offset = 0x4, fixed_abs, tag = 'smem constant byte address 0x4 - core index']
  #allocation1 [shape = 'u32[144,128]{1,0:T(1,128)}', space=vmem, size = 0x12000, scoped, tag = 'internal scratch']
  #allocation2 [shape = 'f32[2,256]{1,0:T(2,128)}', space=vmem, size = 0x800, scoped, tag = 'scratch operand']
  #allocation3 [shape = 'f32[8,2,128]{2,1,0:T(2,128)}', space=vmem, size = 0x2000, scoped, tag = 'scratch operand']
  #allocation4 [shape = 'f32[1,1]{1,0:T(1,128)S(1)}', space=vmem, size = 0x200, scoped, tag = 'scoped memory for tpu_custom_call.1']
  %s0 = inlined_call_operand.vmem [shape: f32[2,8], index: 0, kind: input, shape index: {}]
  %s1 = inlined_call_operand.vmem [shape: f32[1,128], index: 1, kind: input, shape index: {}]
  %s2 = inlined_call_operand.hbm [shape: f32[128,128], index: 2, kind: input, shape index: {}]
  %s3 = inlined_call_operand.vmem [shape: f32[1,128], index: 3, kind: input, shape index: {}]
  %s4 = inlined_call_operand.hbm [shape: f32[256,128], index: 4, kind: input, shape index: {}]
  %s5 = inlined_call_operand.vmem [shape: f32[1,128], index: 5, kind: input, shape index: {}]
  %s6 = inlined_call_operand.vmem [shape: f32[1,128], index: 6, kind: input, shape index: {}]
  %s7 = inlined_call_operand.<no memory space> [shape: f32[1,1], index: 7, kind: input, shape index: {}]
  %s8 = inlined_call_operand.hbm [shape: f32[2,8], index: 8, kind: output, shape index: {}]
  %s9 = sld [smem:[#allocation0]]
  $region54: #{tpu_custom_call.1} parent=0
    _
  %s11 = ssub.s32 1, %s9
  %s12 = scalar_select 0, %s11, %s9
  %v13 = vstv %s7
  %14 = vst [vmem:[#allocation4] sm:$0x1] %v13
  $region1: #{tpu_custom_call.1} parent=0
    #allocation5 [shape = 'u8[65536]{0}', space=vmem, size = 0x10000, scoped, tag = 'input window, operand 2, single buffered']
    #allocation6 [shape = 's32[1]{0}', space=sflag, size = 0x4, scoped, tag = 'scoped memory for tpu_custom_call.1']
    #allocation7 [shape = 's32[1]{0}', space=sflag, size = 0x4, scoped, tag = 'scoped memory for tpu_custom_call.1']
    #allocation8 [shape = 'u8[131072]{0}', space=vmem, size = 0x20000, scoped, tag = 'input window, operand 4, single buffered']
    #allocation9 [shape = 's32[1]{0}', space=sflag, size = 0x4, scoped, tag = 'scoped memory for tpu_custom_call.1']
    #allocation10 [shape = 'u8[1024]{0}', space=vmem, size = 0x400, scoped, tag = 'output window, operand 0, single buffered']
    %15 = vsyncpa [#allocation6], 0
    %16 = vsyncpa [#allocation9], 0
    %17 = vsyncpa [#allocation7], 0
    // Predicated region
    $region2: #{tpu_custom_call.1} parent=1 // pred_check
      _
    $region3: #{tpu_custom_call.1} parent=1 // pred_check_branch
      %19 = sbr.rel (0) target = $region5
    $region4: #{tpu_custom_call.1} parent=1 // pred_region
      _
    $region5: #{tpu_custom_call.1} parent=1 // pred_fallthru
      _
    // Predicated region
    $region6: #{tpu_custom_call.1} parent=1 // pred_check
      _
    $region7: #{tpu_custom_call.1} parent=1 // pred_check_branch
      %21 = sbr.rel (0) target = $region9
    $region8: #{tpu_custom_call.1} parent=1 // pred_region
      _
    $region9: #{tpu_custom_call.1} parent=1 // pred_fallthru
      _
    // Predicated region
    $region10: #{tpu_custom_call.1} parent=1 // pred_check
      _
    $region11: #{tpu_custom_call.1} parent=1 // pred_check_branch
      %23 = sbr.rel (0) target = $region13
    $region12: #{tpu_custom_call.1} parent=1 // pred_region
      %s25 = ssub.s32 2048, 2048
      %26 = vsyncadd [#allocation6], %s25
      %s27 = sshll.u32 [#allocation5], 4
      %s28 = int_to_ptr.vmem [resolvable:$true] %s27
      %33 = dma.hbm_to_vmem [thread:$0]  %s2, 2048, %s28, [#allocation6], 128, 128, 8
    $region13: #{tpu_custom_call.1} parent=1 // pred_fallthru
      _
    // Predicated region
    $region14: #{tpu_custom_call.1} parent=1 // pred_check
      _
    $region15: #{tpu_custom_call.1} parent=1 // pred_check_branch
      %35 = sbr.rel (0) target = $region17
    $region16: #{tpu_custom_call.1} parent=1 // pred_region
      _
    $region17: #{tpu_custom_call.1} parent=1 // pred_fallthru
      _
    // Predicated region
    $region18: #{tpu_custom_call.1} parent=1 // pred_check
      _
    $region19: #{tpu_custom_call.1} parent=1 // pred_check_branch
      %37 = sbr.rel (0) target = $region21
    $region20: #{tpu_custom_call.1} parent=1 // pred_region
      %s39 = ssub.s32 4096, 4096
      %40 = vsyncadd [#allocation9], %s39
      %s41 = sshll.u32 [#allocation8], 4
      %s42 = int_to_ptr.vmem [resolvable:$true] %s41
      %47 = dma.hbm_to_vmem [thread:$0]  %s4, 4096, %s42, [#allocation9], 128, 128, 8
    $region21: #{tpu_custom_call.1} parent=1 // pred_fallthru
      _
    // Predicated region
    $region22: #{tpu_custom_call.1} parent=1 // pred_check
      _
    $region23: #{tpu_custom_call.1} parent=1 // pred_check_branch
      %49 = sbr.rel (0) target = $region25
    $region24: #{tpu_custom_call.1} parent=1 // pred_region
      _
    $region25: #{tpu_custom_call.1} parent=1 // pred_fallthru
      _
    // Predicated region
    $region26: #{tpu_custom_call.1} parent=1 // pred_check
      _
    $region27: #{tpu_custom_call.1} parent=1 // pred_check_branch
      %51 = sbr.rel (0) target = $region29
    $region28: #{tpu_custom_call.1} parent=1 // pred_region
      _
    $region29: #{tpu_custom_call.1} parent=1 // pred_fallthru
      _
    // Predicated region
    $region30: #{tpu_custom_call.1} parent=1 // pred_check
      _
    $region31: #{tpu_custom_call.1} parent=1 // pred_check_branch
      %53 = sbr.rel (0) target = $region33
    $region32: #{tpu_custom_call.1} parent=1 // pred_region
      _
    $region33: #{tpu_custom_call.1} parent=1 // pred_fallthru
      _
    // Predicated region
    $region34: #{tpu_custom_call.1} parent=1 // pred_check
      _
    $region35: #{tpu_custom_call.1} parent=1 // pred_check_branch
      %55 = sbr.rel (0) target = $region37
    $region36: #{tpu_custom_call.1} parent=1 // pred_region
      %56 = dma.done [#allocation6], 2048
    $region37: #{tpu_custom_call.1} parent=1 // pred_fallthru
      _
    // Predicated region
    $region38: #{tpu_custom_call.1} parent=1 // pred_check
      _
    $region39: #{tpu_custom_call.1} parent=1 // pred_check_branch
      %58 = sbr.rel (0) target = $region41
    $region40: #{tpu_custom_call.1} parent=1 // pred_region
      %59 = dma.done [#allocation9], 4096
    $region41: #{tpu_custom_call.1} parent=1 // pred_fallthru
      _
    %p60 = scmp.eq.s32.totalorder 0, 0
    // Predicated region
    $region42: #{tpu_custom_call.1} parent=1 // pred_check
      %p61 = pneg %p60
    $region43: #{tpu_custom_call.1} parent=1 // pred_check_branch
      %63 = sbr.rel (%p61) target = $region45
    $region44: #{tpu_custom_call.1} parent=1 // pred_region
      %64 = vst [vmem:[#allocation2] sm:$0xf] 0.0
    $region45: #{tpu_custom_call.1} parent=1 // pred_fallthru
      _
    %v65 = vld [vmem:[%s0] sm:$0x3]
    %66 = vxpose.xlu0.b32.start [1/16] %v65, 128
    %67 = vxpose.xlu0.b32.cont [2/16] 0.0, 128
    %68 = vxpose.xlu0.b32.cont [3/16] 0.0, 128
    %69 = vxpose.xlu0.b32.cont [4/16] 0.0, 128
    %70 = vxpose.xlu0.b32.cont [5/16] 0.0, 128
    %71 = vxpose.xlu0.b32.cont [6/16] 0.0, 128
    %72 = vxpose.xlu0.b32.cont [7/16] 0.0, 128
    %73 = vxpose.xlu0.b32.cont [8/16] 0.0, 128
    %74 = vxpose.xlu0.b32.cont [9/16] 0.0, 128
    %75 = vxpose.xlu0.b32.cont [10/16] 0.0, 128
    %76 = vxpose.xlu0.b32.cont [11/16] 0.0, 128
    %77 = vxpose.xlu0.b32.cont [12/16] 0.0, 128
    %78 = vxpose.xlu0.b32.cont [13/16] 0.0, 128
    %79 = vxpose.xlu0.b32.cont [14/16] 0.0, 128
    %80 = vxpose.xlu0.b32.cont [15/16] 0.0, 128
    %81 = vxpose.xlu0.b32.end [16/16] 0.0, 128
    %v82 = vpop.trf.xlu0
    %v83 = vpop.trf.xlu0
    %v84 = vpop.trf.xlu0
    %v85 = vpop.trf.xlu0
    %v86 = vpop.trf.xlu0
    %v87 = vpop.trf.xlu0
    %v88 = vpop.trf.xlu0
    %v89 = vpop.trf.xlu0
    %v90 = vpop.trf.xlu0
    %v91 = vpop.trf.xlu0
    %v92 = vpop.trf.xlu0
    %v93 = vpop.trf.xlu0
    %v94 = vpop.trf.xlu0
    %v95 = vpop.trf.xlu0
    %v96 = vpop.trf.xlu0
    %v97 = vpop.trf.xlu0
    %v98 = vld [vmem:[%s1] sm:$0x1]
    %v99 = vld [vmem:[%s3] sm:$0x1]
    %v100 = vlaneseq
    %v101 = vshrl.u32 %v100, 7
    %v102 = vsub.s32 0, %v101
    %v103 = vrot.slane %v82, %v102
    %105 = vbcast.lane.b32.xlu0 %v103, 256
    %v106 = vpop.permute.xlu0 %105
    %v107 = vlaneseq
    %v108 = vshrl.u32 %v107, 7
    %v109 = vsub.s32 1, %v108
    %v110 = vrot.slane %v82, %v109
    %112 = vbcast.lane.b32.xlu0 %v110, 256
    %v113 = vpop.permute.xlu0 %112
    %v114 = vlaneseq
    %v115 = vshrl.u32 %v114, 7
    %v116 = vsub.s32 2, %v115
    %v117 = vrot.slane %v82, %v116
    %119 = vbcast.lane.b32.xlu0 %v117, 256
    %v120 = vpop.permute.xlu0 %119
    %v121 = vlaneseq
    %v122 = vshrl.u32 %v121, 7
    %v123 = vsub.s32 3, %v122
    %v124 = vrot.slane %v82, %v123
    %126 = vbcast.lane.b32.xlu0 %v124, 256
    %v127 = vpop.permute.xlu0 %126
    %v128 = vlaneseq
    %v129 = vshrl.u32 %v128, 7
    %v130 = vsub.s32 4, %v129
    %v131 = vrot.slane %v82, %v130
    %133 = vbcast.lane.b32.xlu0 %v131, 256
    %v134 = vpop.permute.xlu0 %133
    %v135 = vlaneseq
    %v136 = vshrl.u32 %v135, 7
    %v137 = vsub.s32 5, %v136
    %v138 = vrot.slane %v82, %v137
    %140 = vbcast.lane.b32.xlu0 %v138, 256
    %v141 = vpop.permute.xlu0 %140
    %v142 = vlaneseq
    %v143 = vshrl.u32 %v142, 7
    %v144 = vsub.s32 6, %v143
    %v145 = vrot.slane %v82, %v144
    %147 = vbcast.lane.b32.xlu0 %v145, 256
    %v148 = vpop.permute.xlu0 %147
    %v149 = vlaneseq
    %v150 = vshrl.u32 %v149, 7
    %v151 = vsub.s32 7, %v150
    %v152 = vrot.slane %v82, %v151
    %154 = vbcast.lane.b32.xlu0 %v152, 256
    %v155 = vpop.permute.xlu0 %154
    %v157 = vlaneseq
    %v158 = vshrl.u32 %v157, 7
    %v159 = vsub.s32 0, %v158
    %v160 = vrot.slane %v98, %v159
    %v162 = vmul.f32 %v106, %v160
    %v163 = vmul.f32 %v113, %v160
    %v164 = vmul.f32 %v120, %v160
    %v165 = vmul.f32 %v127, %v160
    %v166 = vmul.f32 %v134, %v160
    %v167 = vmul.f32 %v141, %v160
    %v168 = vmul.f32 %v148, %v160
    %v169 = vmul.f32 %v155, %v160
    %v171 = vlaneseq
    %v172 = vshrl.u32 %v171, 7
    %v173 = vsub.s32 0, %v172
    %v174 = vrot.slane %v99, %v173
    %v176 = vadd.f32 %v162, %v174
    %v177 = vadd.f32 %v163, %v174
    %v178 = vadd.f32 %v164, %v174
    %v179 = vadd.f32 %v165, %v174
    %v180 = vadd.f32 %v166, %v174
    %v181 = vadd.f32 %v167, %v174
    %v182 = vadd.f32 %v168, %v174
    %v183 = vadd.f32 %v169, %v174
    %184 = vst [vmem:[#allocation3] sm:$0x3] %v176
    %185 = vst [vmem:[#allocation3 + $0x2] sm:$0x3] %v177
    %186 = vst [vmem:[#allocation3 + $0x4] sm:$0x3] %v178
    %187 = vst [vmem:[#allocation3 + $0x6] sm:$0x3] %v179
    %188 = vst [vmem:[#allocation3 + $0x8] sm:$0x3] %v180
    %189 = vst [vmem:[#allocation3 + $0xa] sm:$0x3] %v181
    %190 = vst [vmem:[#allocation3 + $0xc] sm:$0x3] %v182
    %191 = vst [vmem:[#allocation3 + $0xe] sm:$0x3] %v183
    %v192 = vld [vmem:[%s5] sm:$0x1]
    %v194 = vlaneseq
    %v195 = vshrl.u32 %v194, 7
    %v196 = vsub.s32 0, %v195
    %v197 = vrot.slane %v192, %v196
    %v199 = vld [vmem:[#allocation3] sm:$0x3]
    %v200 = vld [vmem:[#allocation2] sm:$0x3]
    %v201 = vld [vmem:[#allocation5] sm:$0xff]
    %v202 = vld [vmem:[#allocation5 + $0x8] sm:$0xff]
    %v203 = vld [vmem:[#allocation5 + $0x10] sm:$0xff]
    %v204 = vld [vmem:[#allocation5 + $0x18] sm:$0xff]
    %v205 = vld [vmem:[#allocation5 + $0x20] sm:$0xff]
    %v206 = vld [vmem:[#allocation5 + $0x28] sm:$0xff]
    %v207 = vld [vmem:[#allocation5 + $0x30] sm:$0xff]
    %v208 = vld [vmem:[#allocation5 + $0x38] sm:$0xff]
    %v209 = vld [vmem:[#allocation5 + $0x40] sm:$0xff]
    %v210 = vld [vmem:[#allocation5 + $0x48] sm:$0xff]
    %v211 = vld [vmem:[#allocation5 + $0x50] sm:$0xff]
    %v212 = vld [vmem:[#allocation5 + $0x58] sm:$0xff]
    %v213 = vld [vmem:[#allocation5 + $0x60] sm:$0xff]
    %v214 = vld [vmem:[#allocation5 + $0x68] sm:$0xff]
    %v215 = vld [vmem:[#allocation5 + $0x70] sm:$0xff]
    %v216 = vld [vmem:[#allocation5 + $0x78] sm:$0xff]
    %217 = vmatprep.subr.mxu0 0.0
    %218 = vmatpush1.msra.mxu0 %v201
    %219 = vmatprep.subr.mxu0 0.0
    %220 = vmatpush1.msra.mxu0 %v202
    %221 = vmatprep.subr.mxu0 0.0
    %222 = vmatpush1.msra.mxu0 %v203
    %223 = vmatprep.subr.mxu0 0.0
    %224 = vmatpush1.msra.mxu0 %v204
    %225 = vmatprep.subr.mxu0 0.0
    %226 = vmatpush1.msra.mxu0 %v205
    %227 = vmatprep.subr.mxu0 0.0
    %228 = vmatpush1.msra.mxu0 %v206
    %229 = vmatprep.subr.mxu0 0.0
    %230 = vmatpush1.msra.mxu0 %v207
    %231 = vmatprep.subr.mxu0 0.0
    %232 = vmatpush1.msra.mxu0 %v208
    %233 = vmatprep.subr.mxu0 0.0
    %234 = vmatpush1.msra.mxu0 %v209
    %235 = vmatprep.subr.mxu0 0.0
    %236 = vmatpush1.msra.mxu0 %v210
    %237 = vmatprep.subr.mxu0 0.0
    %238 = vmatpush1.msra.mxu0 %v211
    %239 = vmatprep.subr.mxu0 0.0
    %240 = vmatpush1.msra.mxu0 %v212
    %241 = vmatprep.subr.mxu0 0.0
    %242 = vmatpush1.msra.mxu0 %v213
    %243 = vmatprep.subr.mxu0 0.0
    %244 = vmatpush1.msra.mxu0 %v214
    %245 = vmatprep.subr.mxu0 0.0
    %246 = vmatpush1.msra.mxu0 %v215
    %247 = vmatprep.subr.mxu0 0.0
    %248 = vmatpush1.msra.mxu0 %v216
    %249 = vmatprep.subr.mxu0 0.0
    %250 = vmatpush1.msra.mxu0 0.0
    %251 = vmatprep.subr.mxu0 0.0
    %252 = vmatpush1.msra.mxu0 0.0
    %253 = vmatprep.subr.mxu0 0.0
    %254 = vmatpush1.msra.mxu0 0.0
    %255 = vmatprep.subr.mxu0 0.0
    %256 = vmatpush1.msra.mxu0 0.0
    %257 = vmatprep.subr.mxu0 0.0
    %258 = vmatpush1.msra.mxu0 0.0
    %259 = vmatprep.subr.mxu0 0.0
    %260 = vmatpush1.msra.mxu0 0.0
    %261 = vmatprep.subr.mxu0 0.0
    %262 = vmatpush1.msra.mxu0 0.0
    %263 = vmatprep.subr.mxu0 0.0
    %264 = vmatpush1.msra.mxu0 0.0
    %265 = vmatprep.subr.mxu0 0.0
    %266 = vmatpush1.msra.mxu0 0.0
    %267 = vmatprep.subr.mxu0 0.0
    %268 = vmatpush1.msra.mxu0 0.0
    %269 = vmatprep.subr.mxu0 0.0
    %270 = vmatpush1.msra.mxu0 0.0
    %271 = vmatprep.subr.mxu0 0.0
    %272 = vmatpush1.msra.mxu0 0.0
    %273 = vmatprep.subr.mxu0 0.0
    %274 = vmatpush1.msra.mxu0 0.0
    %275 = vmatprep.subr.mxu0 0.0
    %276 = vmatpush1.msra.mxu0 0.0
    %277 = vmatprep.subr.mxu0 0.0
    %278 = vmatpush1.msra.mxu0 0.0
    %279 = vmatprep.subr.mxu0 0.0
    %280 = vmatpush1.msra.mxu0 0.0
    %281 = vmatprep.mubr.f32.mxu0 0.0
    %282 = vmatmul.mubr.f32.gmra.mrb[0].mxu0 %v200
    %v283 = vpop.f32.mrb[0].mxu0
    %v284 = vadd.f32 0.0, %v283
    %v285 = vpop.f32.mrb[0].mxu0
    %286 = vdwg.mxu0
    %v287 = vadd.f32 %v199, %v284
    %v288 = vtanh.pop %v287
    %289 = vst [vmem:[#allocation2] sm:$0x3] %v288
    %v290 = vld [vmem:[#allocation2] sm:$0xf]
    %v291 = vld [vmem:[#allocation8] sm:$0xff]
    %v292 = vld [vmem:[#allocation8 + $0x8] sm:$0xff]
    %v293 = vld [vmem:[#allocation8 + $0x10] sm:$0xff]
    %v294 = vld [vmem:[#allocation8 + $0x18] sm:$0xff]
    %v295 = vld [vmem:[#allocation8 + $0x20] sm:$0xff]
    %v296 = vld [vmem:[#allocation8 + $0x28] sm:$0xff]
    %v297 = vld [vmem:[#allocation8 + $0x30] sm:$0xff]
    %v298 = vld [vmem:[#allocation8 + $0x38] sm:$0xff]
    %v299 = vld [vmem:[#allocation8 + $0x40] sm:$0xff]
    %v300 = vld [vmem:[#allocation8 + $0x48] sm:$0xff]
    %v301 = vld [vmem:[#allocation8 + $0x50] sm:$0xff]
    %v302 = vld [vmem:[#allocation8 + $0x58] sm:$0xff]
    %v303 = vld [vmem:[#allocation8 + $0x60] sm:$0xff]
    %v304 = vld [vmem:[#allocation8 + $0x68] sm:$0xff]
    %v305 = vld [vmem:[#allocation8 + $0x70] sm:$0xff]
    %v306 = vld [vmem:[#allocation8 + $0x78] sm:$0xff]
    %v307 = vld [vmem:[#allocation8 + $0x80] sm:$0xff]
    %v308 = vld [vmem:[#allocation8 + $0x88] sm:$0xff]
    %v309 = vld [vmem:[#allocation8 + $0x90] sm:$0xff]
    %v310 = vld [vmem:[#allocation8 + $0x98] sm:$0xff]
    %v311 = vld [vmem:[#allocation8 + $0xa0] sm:$0xff]
    %v312 = vld [vmem:[#allocation8 + $0xa8] sm:$0xff]
    %v313 = vld [vmem:[#allocation8 + $0xb0] sm:$0xff]
    %v314 = vld [vmem:[#allocation8 + $0xb8] sm:$0xff]
    %v315 = vld [vmem:[#allocation8 + $0xc0] sm:$0xff]
    %v316 = vld [vmem:[#allocation8 + $0xc8] sm:$0xff]
    %v317 = vld [vmem:[#allocation8 + $0xd0] sm:$0xff]
    %v318 = vld [vmem:[#allocation8 + $0xd8] sm:$0xff]
    %v319 = vld [vmem:[#allocation8 + $0xe0] sm:$0xff]
    %v320 = vld [vmem:[#allocation8 + $0xe8] sm:$0xff]
    %v321 = vld [vmem:[#allocation8 + $0xf0] sm:$0xff]
    %v322 = vld [vmem:[#allocation8 + $0xf8] sm:$0xff]
    %v325 = vunpack.c.l.s4 1983009808
    %v326 = vunpack.c.0.s8 %v325
    %v327 = vlaneseq
    %v328 = vshrl.u32 %v327, 7
    %v329 = vsub.s32 %v326, %v328
    %v330 = vrot.slane %v290, %v329
    %v331 = vcombine.high %v330, %v330
    %334 = vmatprep.subr.mxu0 0.0
    %335 = vmatpush1.msra.mxu0 %v291
    %336 = vmatprep.subr.mxu0 0.0
    %337 = vmatpush1.msra.mxu0 %v292
    %338 = vmatprep.subr.mxu0 0.0
    %339 = vmatpush1.msra.mxu0 %v293
    %340 = vmatprep.subr.mxu0 0.0
    %341 = vmatpush1.msra.mxu0 %v294
    %342 = vmatprep.subr.mxu0 0.0
    %343 = vmatpush1.msra.mxu0 %v295
    %344 = vmatprep.subr.mxu0 0.0
    %345 = vmatpush1.msra.mxu0 %v296
    %346 = vmatprep.subr.mxu0 0.0
    %347 = vmatpush1.msra.mxu0 %v297
    %348 = vmatprep.subr.mxu0 0.0
    %349 = vmatpush1.msra.mxu0 %v298
    %350 = vmatprep.subr.mxu0 0.0
    %351 = vmatpush1.msra.mxu0 %v299
    %352 = vmatprep.subr.mxu0 0.0
    %353 = vmatpush1.msra.mxu0 %v300
    %354 = vmatprep.subr.mxu0 0.0
    %355 = vmatpush1.msra.mxu0 %v301
    %356 = vmatprep.subr.mxu0 0.0
    %357 = vmatpush1.msra.mxu0 %v302
    %358 = vmatprep.subr.mxu0 0.0
    %359 = vmatpush1.msra.mxu0 %v303
    %360 = vmatprep.subr.mxu0 0.0
    %361 = vmatpush1.msra.mxu0 %v304
    %362 = vmatprep.subr.mxu0 0.0
    %363 = vmatpush1.msra.mxu0 %v305
    %364 = vmatprep.subr.mxu0 0.0
    %365 = vmatpush1.msra.mxu0 %v306
    %366 = vmatprep.subr.mxu0 0.0
    %367 = vmatpush1.msra.mxu0 %v307
    %368 = vmatprep.subr.mxu0 0.0
    %369 = vmatpush1.msra.mxu0 %v308
    %370 = vmatprep.subr.mxu0 0.0
    %371 = vmatpush1.msra.mxu0 %v309
    %372 = vmatprep.subr.mxu0 0.0
    %373 = vmatpush1.msra.mxu0 %v310
    %374 = vmatprep.subr.mxu0 0.0
    %375 = vmatpush1.msra.mxu0 %v311
    %376 = vmatprep.subr.mxu0 0.0
    %377 = vmatpush1.msra.mxu0 %v312
    %378 = vmatprep.subr.mxu0 0.0
    %379 = vmatpush1.msra.mxu0 %v313
    %380 = vmatprep.subr.mxu0 0.0
    %381 = vmatpush1.msra.mxu0 %v314
    %382 = vmatprep.subr.mxu0 0.0
    %383 = vmatpush1.msra.mxu0 %v315
    %384 = vmatprep.subr.mxu0 0.0
    %385 = vmatpush1.msra.mxu0 %v316
    %386 = vmatprep.subr.mxu0 0.0
    %387 = vmatpush1.msra.mxu0 %v317
    %388 = vmatprep.subr.mxu0 0.0
    %389 = vmatpush1.msra.mxu0 %v318
    %390 = vmatprep.subr.mxu0 0.0
    %391 = vmatpush1.msra.mxu0 %v319
    %392 = vmatprep.subr.mxu0 0.0
    %393 = vmatpush1.msra.mxu0 %v320
    %394 = vmatprep.subr.mxu0 0.0
    %395 = vmatpush1.msra.mxu0 %v321
    %396 = vmatprep.subr.mxu0 0.0
    %397 = vmatpush1.msra.mxu0 %v322
    %398 = vmatprep.mubr.f32.mxu0 %v331
    %399 = vmatmul.mubr.f32.gmra.mrb[0].mxu0 %v330
    %v400 = vpop.f32.mrb[0].mxu0
    %v401 = vadd.f32 %v197, %v400
    %v402 = vpop.f32.mrb[0].mxu0
    %403 = vdwg.mxu0
    %v404 = vtanh.pop %v401
    %405 = vst [vmem:[#allocation2 + $0x2] sm:$0x3] %v404
    %406 = vst [vmem:[#allocation3] sm:$0x3] %v404
    %s407 = scalar_lea.vmem [#allocation3], 2
    %v408 = vld [vmem:[%s407] sm:$0x3]
    %v409 = vld [vmem:[#allocation2] sm:$0x3]
    %v410 = vld [vmem:[#allocation5] sm:$0xff]
    %v411 = vld [vmem:[#allocation5 + $0x8] sm:$0xff]
    %v412 = vld [vmem:[#allocation5 + $0x10] sm:$0xff]
    %v413 = vld [vmem:[#allocation5 + $0x18] sm:$0xff]
    %v414 = vld [vmem:[#allocation5 + $0x20] sm:$0xff]
    %v415 = vld [vmem:[#allocation5 + $0x28] sm:$0xff]
    %v416 = vld [vmem:[#allocation5 + $0x30] sm:$0xff]
    %v417 = vld [vmem:[#allocation5 + $0x38] sm:$0xff]
    %v418 = vld [vmem:[#allocation5 + $0x40] sm:$0xff]
    %v419 = vld [vmem:[#allocation5 + $0x48] sm:$0xff]
    %v420 = vld [vmem:[#allocation5 + $0x50] sm:$0xff]
    %v421 = vld [vmem:[#allocation5 + $0x58] sm:$0xff]
    %v422 = vld [vmem:[#allocation5 + $0x60] sm:$0xff]
    %v423 = vld [vmem:[#allocation5 + $0x68] sm:$0xff]
    %v424 = vld [vmem:[#allocation5 + $0x70] sm:$0xff]
    %v425 = vld [vmem:[#allocation5 + $0x78] sm:$0xff]
    %426 = vmatprep.subr.mxu0 0.0
    %427 = vmatpush1.msra.mxu0 %v410
    %428 = vmatprep.subr.mxu0 0.0
    %429 = vmatpush1.msra.mxu0 %v411
    %430 = vmatprep.subr.mxu0 0.0
    %431 = vmatpush1.msra.mxu0 %v412
    %432 = vmatprep.subr.mxu0 0.0
    %433 = vmatpush1.msra.mxu0 %v413
    %434 = vmatprep.subr.mxu0 0.0
    %435 = vmatpush1.msra.mxu0 %v414
    %436 = vmatprep.subr.mxu0 0.0
    %437 = vmatpush1.msra.mxu0 %v415
    %438 = vmatprep.subr.mxu0 0.0
    %439 = vmatpush1.msra.mxu0 %v416
    %440 = vmatprep.subr.mxu0 0.0
    %441 = vmatpush1.msra.mxu0 %v417
    %442 = vmatprep.subr.mxu0 0.0
    %443 = vmatpush1.msra.mxu0 %v418
    %444 = vmatprep.subr.mxu0 0.0
    %445 = vmatpush1.msra.mxu0 %v419
    %446 = vmatprep.subr.mxu0 0.0
    %447 = vmatpush1.msra.mxu0 %v420
    %448 = vmatprep.subr.mxu0 0.0
    %449 = vmatpush1.msra.mxu0 %v421
    %450 = vmatprep.subr.mxu0 0.0
    %451 = vmatpush1.msra.mxu0 %v422
    %452 = vmatprep.subr.mxu0 0.0
    %453 = vmatpush1.msra.mxu0 %v423
    %454 = vmatprep.subr.mxu0 0.0
    %455 = vmatpush1.msra.mxu0 %v424
    %456 = vmatprep.subr.mxu0 0.0
    %457 = vmatpush1.msra.mxu0 %v425
    %458 = vmatprep.subr.mxu0 0.0
    %459 = vmatpush1.msra.mxu0 0.0
    %460 = vmatprep.subr.mxu0 0.0
    %461 = vmatpush1.msra.mxu0 0.0
    %462 = vmatprep.subr.mxu0 0.0
    %463 = vmatpush1.msra.mxu0 0.0
    %464 = vmatprep.subr.mxu0 0.0
    %465 = vmatpush1.msra.mxu0 0.0
    %466 = vmatprep.subr.mxu0 0.0
    %467 = vmatpush1.msra.mxu0 0.0
    %468 = vmatprep.subr.mxu0 0.0
    %469 = vmatpush1.msra.mxu0 0.0
    %470 = vmatprep.subr.mxu0 0.0
    %471 = vmatpush1.msra.mxu0 0.0
    %472 = vmatprep.subr.mxu0 0.0
    %473 = vmatpush1.msra.mxu0 0.0
    %474 = vmatprep.subr.mxu0 0.0
    %475 = vmatpush1.msra.mxu0 0.0
    %476 = vmatprep.subr.mxu0 0.0
    %477 = vmatpush1.msra.mxu0 0.0
    %478 = vmatprep.subr.mxu0 0.0
    %479 = vmatpush1.msra.mxu0 0.0
    %480 = vmatprep.subr.mxu0 0.0
    %481 = vmatpush1.msra.mxu0 0.0
    %482 = vmatprep.subr.mxu0 0.0
    %483 = vmatpush1.msra.mxu0 0.0
    %484 = vmatprep.subr.mxu0 0.0
    %485 = vmatpush1.msra.mxu0 0.0
    %486 = vmatprep.subr.mxu0 0.0
    %487 = vmatpush1.msra.mxu0 0.0
    %488 = vmatprep.subr.mxu0 0.0
    %489 = vmatpush1.msra.mxu0 0.0
    %490 = vmatprep.mubr.f32.mxu0 0.0
    %491 = vmatmul.mubr.f32.gmra.mrb[0].mxu0 %v409
    %v492 = vpop.f32.mrb[0].mxu0
    %v493 = vadd.f32 0.0, %v492
    %v494 = vpop.f32.mrb[0].mxu0
    %495 = vdwg.mxu0
    %v496 = vadd.f32 %v408, %v493
    %v497 = vtanh.pop %v496
    %498 = vst [vmem:[#allocation2] sm:$0x3] %v497
    %v499 = vld [vmem:[#allocation2] sm:$0xf]
    %v500 = vld [vmem:[#allocation8] sm:$0xff]
    %v501 = vld [vmem:[#allocation8 + $0x8] sm:$0xff]
    %v502 = vld [vmem:[#allocation8 + $0x10] sm:$0xff]
    %v503 = vld [vmem:[#allocation8 + $0x18] sm:$0xff]
    %v504 = vld [vmem:[#allocation8 + $0x20] sm:$0xff]
    %v505 = vld [vmem:[#allocation8 + $0x28] sm:$0xff]
    %v506 = vld [vmem:[#allocation8 + $0x30] sm:$0xff]
    %v507 = vld [vmem:[#allocation8 + $0x38] sm:$0xff]
    %v508 = vld [vmem:[#allocation8 + $0x40] sm:$0xff]
    %v509 = vld [vmem:[#allocation8 + $0x48] sm:$0xff]
    %v510 = vld [vmem:[#allocation8 + $0x50] sm:$0xff]
    %v511 = vld [vmem:[#allocation8 + $0x58] sm:$0xff]
    %v512 = vld [vmem:[#allocation8 + $0x60] sm:$0xff]
    %v513 = vld [vmem:[#allocation8 + $0x68] sm:$0xff]
    %v514 = vld [vmem:[#allocation8 + $0x70] sm:$0xff]
    %v515 = vld [vmem:[#allocation8 + $0x78] sm:$0xff]
    %v516 = vld [vmem:[#allocation8 + $0x80] sm:$0xff]
    %v517 = vld [vmem:[#allocation8 + $0x88] sm:$0xff]
    %v518 = vld [vmem:[#allocation8 + $0x90] sm:$0xff]
    %v519 = vld [vmem:[#allocation8 + $0x98] sm:$0xff]
    %v520 = vld [vmem:[#allocation8 + $0xa0] sm:$0xff]
    %v521 = vld [vmem:[#allocation8 + $0xa8] sm:$0xff]
    %v522 = vld [vmem:[#allocation8 + $0xb0] sm:$0xff]
    %v523 = vld [vmem:[#allocation8 + $0xb8] sm:$0xff]
    %v524 = vld [vmem:[#allocation8 + $0xc0] sm:$0xff]
    %v525 = vld [vmem:[#allocation8 + $0xc8] sm:$0xff]
    %v526 = vld [vmem:[#allocation8 + $0xd0] sm:$0xff]
    %v527 = vld [vmem:[#allocation8 + $0xd8] sm:$0xff]
    %v528 = vld [vmem:[#allocation8 + $0xe0] sm:$0xff]
    %v529 = vld [vmem:[#allocation8 + $0xe8] sm:$0xff]
    %v530 = vld [vmem:[#allocation8 + $0xf0] sm:$0xff]
    %v531 = vld [vmem:[#allocation8 + $0xf8] sm:$0xff]
    %v534 = vunpack.c.l.s4 1983009808
    %v535 = vunpack.c.0.s8 %v534
    %v536 = vlaneseq
    %v537 = vshrl.u32 %v536, 7
    %v538 = vsub.s32 %v535, %v537
    %v539 = vrot.slane %v499, %v538
    %v540 = vcombine.high %v539, %v539
    %543 = vmatprep.subr.mxu0 0.0
    %544 = vmatpush1.msra.mxu0 %v500
    %545 = vmatprep.subr.mxu0 0.0
    %546 = vmatpush1.msra.mxu0 %v501
    %547 = vmatprep.subr.mxu0 0.0
    %548 = vmatpush1.msra.mxu0 %v502
    %549 = vmatprep.subr.mxu0 0.0
    %550 = vmatpush1.msra.mxu0 %v503
    %551 = vmatprep.subr.mxu0 0.0
    %552 = vmatpush1.msra.mxu0 %v504
    %553 = vmatprep.subr.mxu0 0.0
    %554 = vmatpush1.msra.mxu0 %v505
    %555 = vmatprep.subr.mxu0 0.0
    %556 = vmatpush1.msra.mxu0 %v506
    %557 = vmatprep.subr.mxu0 0.0
    %558 = vmatpush1.msra.mxu0 %v507
    %559 = vmatprep.subr.mxu0 0.0
    %560 = vmatpush1.msra.mxu0 %v508
    %561 = vmatprep.subr.mxu0 0.0
    %562 = vmatpush1.msra.mxu0 %v509
    %563 = vmatprep.subr.mxu0 0.0
    %564 = vmatpush1.msra.mxu0 %v510
    %565 = vmatprep.subr.mxu0 0.0
    %566 = vmatpush1.msra.mxu0 %v511
    %567 = vmatprep.subr.mxu0 0.0
    %568 = vmatpush1.msra.mxu0 %v512
    %569 = vmatprep.subr.mxu0 0.0
    %570 = vmatpush1.msra.mxu0 %v513
    %571 = vmatprep.subr.mxu0 0.0
    %572 = vmatpush1.msra.mxu0 %v514
    %573 = vmatprep.subr.mxu0 0.0
    %574 = vmatpush1.msra.mxu0 %v515
    %575 = vmatprep.subr.mxu0 0.0
    %576 = vmatpush1.msra.mxu0 %v516
    %577 = vmatprep.subr.mxu0 0.0
    %578 = vmatpush1.msra.mxu0 %v517
    %579 = vmatprep.subr.mxu0 0.0
    %580 = vmatpush1.msra.mxu0 %v518
    %581 = vmatprep.subr.mxu0 0.0
    %582 = vmatpush1.msra.mxu0 %v519
    %583 = vmatprep.subr.mxu0 0.0
    %584 = vmatpush1.msra.mxu0 %v520
    %585 = vmatprep.subr.mxu0 0.0
    %586 = vmatpush1.msra.mxu0 %v521
    %587 = vmatprep.subr.mxu0 0.0
    %588 = vmatpush1.msra.mxu0 %v522
    %589 = vmatprep.subr.mxu0 0.0
    %590 = vmatpush1.msra.mxu0 %v523
    %591 = vmatprep.subr.mxu0 0.0
    %592 = vmatpush1.msra.mxu0 %v524
    %593 = vmatprep.subr.mxu0 0.0
    %594 = vmatpush1.msra.mxu0 %v525
    %595 = vmatprep.subr.mxu0 0.0
    %596 = vmatpush1.msra.mxu0 %v526
    %597 = vmatprep.subr.mxu0 0.0
    %598 = vmatpush1.msra.mxu0 %v527
    %599 = vmatprep.subr.mxu0 0.0
    %600 = vmatpush1.msra.mxu0 %v528
    %601 = vmatprep.subr.mxu0 0.0
    %602 = vmatpush1.msra.mxu0 %v529
    %603 = vmatprep.subr.mxu0 0.0
    %604 = vmatpush1.msra.mxu0 %v530
    %605 = vmatprep.subr.mxu0 0.0
    %606 = vmatpush1.msra.mxu0 %v531
    %607 = vmatprep.mubr.f32.mxu0 %v540
    %608 = vmatmul.mubr.f32.gmra.mrb[0].mxu0 %v539
    %v609 = vpop.f32.mrb[0].mxu0
    %v610 = vadd.f32 %v197, %v609
    %v611 = vpop.f32.mrb[0].mxu0
    %612 = vdwg.mxu0
    %v613 = vtanh.pop %v610
    %614 = vst [vmem:[#allocation2 + $0x2] sm:$0x3] %v613
    %615 = vst [vmem:[%s407] sm:$0x3] %v613
    %s616 = scalar_lea.vmem [#allocation3], 4
    %v617 = vld [vmem:[%s616] sm:$0x3]
    %v618 = vld [vmem:[#allocation2] sm:$0x3]
    %v619 = vld [vmem:[#allocation5] sm:$0xff]
    %v620 = vld [vmem:[#allocation5 + $0x8] sm:$0xff]
    %v621 = vld [vmem:[#allocation5 + $0x10] sm:$0xff]
    %v622 = vld [vmem:[#allocation5 + $0x18] sm:$0xff]
    %v623 = vld [vmem:[#allocation5 + $0x20] sm:$0xff]
    %v624 = vld [vmem:[#allocation5 + $0x28] sm:$0xff]
    %v625 = vld [vmem:[#allocation5 + $0x30] sm:$0xff]
    %v626 = vld [vmem:[#allocation5 + $0x38] sm:$0xff]
    %v627 = vld [vmem:[#allocation5 + $0x40] sm:$0xff]
    %v628 = vld [vmem:[#allocation5 + $0x48] sm:$0xff]
    %v629 = vld [vmem:[#allocation5 + $0x50] sm:$0xff]
    %v630 = vld [vmem:[#allocation5 + $0x58] sm:$0xff]
    %v631 = vld [vmem:[#allocation5 + $0x60] sm:$0xff]
    %v632 = vld [vmem:[#allocation5 + $0x68] sm:$0xff]
    %v633 = vld [vmem:[#allocation5 + $0x70] sm:$0xff]
    %v634 = vld [vmem:[#allocation5 + $0x78] sm:$0xff]
    %635 = vmatprep.subr.mxu0 0.0
    %636 = vmatpush1.msra.mxu0 %v619
    %637 = vmatprep.subr.mxu0 0.0
    %638 = vmatpush1.msra.mxu0 %v620
    %639 = vmatprep.subr.mxu0 0.0
    %640 = vmatpush1.msra.mxu0 %v621
    %641 = vmatprep.subr.mxu0 0.0
    %642 = vmatpush1.msra.mxu0 %v622
    %643 = vmatprep.subr.mxu0 0.0
    %644 = vmatpush1.msra.mxu0 %v623
    %645 = vmatprep.subr.mxu0 0.0
    %646 = vmatpush1.msra.mxu0 %v624
    %647 = vmatprep.subr.mxu0 0.0
    %648 = vmatpush1.msra.mxu0 %v625
    %649 = vmatprep.subr.mxu0 0.0
    %650 = vmatpush1.msra.mxu0 %v626
    %651 = vmatprep.subr.mxu0 0.0
    %652 = vmatpush1.msra.mxu0 %v627
    %653 = vmatprep.subr.mxu0 0.0
    %654 = vmatpush1.msra.mxu0 %v628
    %655 = vmatprep.subr.mxu0 0.0
    %656 = vmatpush1.msra.mxu0 %v629
    %657 = vmatprep.subr.mxu0 0.0
    %658 = vmatpush1.msra.mxu0 %v630
    %659 = vmatprep.subr.mxu0 0.0
    %660 = vmatpush1.msra.mxu0 %v631
    %661 = vmatprep.subr.mxu0 0.0
    %662 = vmatpush1.msra.mxu0 %v632
    %663 = vmatprep.subr.mxu0 0.0
    %664 = vmatpush1.msra.mxu0 %v633
    %665 = vmatprep.subr.mxu0 0.0
    %666 = vmatpush1.msra.mxu0 %v634
    %667 = vmatprep.subr.mxu0 0.0
    %668 = vmatpush1.msra.mxu0 0.0
    %669 = vmatprep.subr.mxu0 0.0
    %670 = vmatpush1.msra.mxu0 0.0
    %671 = vmatprep.subr.mxu0 0.0
    %672 = vmatpush1.msra.mxu0 0.0
    %673 = vmatprep.subr.mxu0 0.0
    %674 = vmatpush1.msra.mxu0 0.0
    %675 = vmatprep.subr.mxu0 0.0
    %676 = vmatpush1.msra.mxu0 0.0
    %677 = vmatprep.subr.mxu0 0.0
    %678 = vmatpush1.msra.mxu0 0.0
    %679 = vmatprep.subr.mxu0 0.0
    %680 = vmatpush1.msra.mxu0 0.0
    %681 = vmatprep.subr.mxu0 0.0
    %682 = vmatpush1.msra.mxu0 0.0
    %683 = vmatprep.subr.mxu0 0.0
    %684 = vmatpush1.msra.mxu0 0.0
    %685 = vmatprep.subr.mxu0 0.0
    %686 = vmatpush1.msra.mxu0 0.0
    %687 = vmatprep.subr.mxu0 0.0
    %688 = vmatpush1.msra.mxu0 0.0
    %689 = vmatprep.subr.mxu0 0.0
    %690 = vmatpush1.msra.mxu0 0.0
    %691 = vmatprep.subr.mxu0 0.0
    %692 = vmatpush1.msra.mxu0 0.0
    %693 = vmatprep.subr.mxu0 0.0
    %694 = vmatpush1.msra.mxu0 0.0
    %695 = vmatprep.subr.mxu0 0.0
    %696 = vmatpush1.msra.mxu0 0.0
    %697 = vmatprep.subr.mxu0 0.0
    %698 = vmatpush1.msra.mxu0 0.0
    %699 = vmatprep.mubr.f32.mxu0 0.0
    %700 = vmatmul.mubr.f32.gmra.mrb[0].mxu0 %v618
    %v701 = vpop.f32.mrb[0].mxu0
    %v702 = vadd.f32 0.0, %v701
    %v703 = vpop.f32.mrb[0].mxu0
    %704 = vdwg.mxu0
    %v705 = vadd.f32 %v617, %v702
    %v706 = vtanh.pop %v705
    %707 = vst [vmem:[#allocation2] sm:$0x3] %v706
    %v708 = vld [vmem:[#allocation2] sm:$0xf]
    %v709 = vld [vmem:[#allocation8] sm:$0xff]
    %v710 = vld [vmem:[#allocation8 + $0x8] sm:$0xff]
    %v711 = vld [vmem:[#allocation8 + $0x10] sm:$0xff]
    %v712 = vld [vmem:[#allocation8 + $0x18] sm:$0xff]
    %v713 = vld [vmem:[#allocation8 + $0x20] sm:$0xff]
    %v714 = vld [vmem:[#allocation8 + $0x28] sm:$0xff]
    %v715 = vld [vmem:[#allocation8 + $0x30] sm:$0xff]
    %v716 = vld [vmem:[#allocation8 + $0x38] sm:$0xff]
    %v717 = vld [vmem:[#allocation8 + $0x40] sm:$0xff]
    %v718 = vld [vmem:[#allocation8 + $0x48] sm:$0xff]
    %v719 = vld [vmem:[#allocation8 + $0x50] sm:$0xff]
    %v720 = vld [vmem:[#allocation8 + $0x58] sm:$0xff]
    %v721 = vld [vmem:[#allocation8 + $0x60] sm:$0xff]
    %v722 = vld [vmem:[#allocation8 + $0x68] sm:$0xff]
    %v723 = vld [vmem:[#allocation8 + $0x70] sm:$0xff]
    %v724 = vld [vmem:[#allocation8 + $0x78] sm:$0xff]
    %v725 = vld [vmem:[#allocation8 + $0x80] sm:$0xff]
    %v726 = vld [vmem:[#allocation8 + $0x88] sm:$0xff]
    %v727 = vld [vmem:[#allocation8 + $0x90] sm:$0xff]
    %v728 = vld [vmem:[#allocation8 + $0x98] sm:$0xff]
    %v729 = vld [vmem:[#allocation8 + $0xa0] sm:$0xff]
    %v730 = vld [vmem:[#allocation8 + $0xa8] sm:$0xff]
    %v731 = vld [vmem:[#allocation8 + $0xb0] sm:$0xff]
    %v732 = vld [vmem:[#allocation8 + $0xb8] sm:$0xff]
    %v733 = vld [vmem:[#allocation8 + $0xc0] sm:$0xff]
    %v734 = vld [vmem:[#allocation8 + $0xc8] sm:$0xff]
    %v735 = vld [vmem:[#allocation8 + $0xd0] sm:$0xff]
    %v736 = vld [vmem:[#allocation8 + $0xd8] sm:$0xff]
    %v737 = vld [vmem:[#allocation8 + $0xe0] sm:$0xff]
    %v738 = vld [vmem:[#allocation8 + $0xe8] sm:$0xff]
    %v739 = vld [vmem:[#allocation8 + $0xf0] sm:$0xff]
    %v740 = vld [vmem:[#allocation8 + $0xf8] sm:$0xff]
    %v743 = vunpack.c.l.s4 1983009808
    %v744 = vunpack.c.0.s8 %v743
    %v745 = vlaneseq
    %v746 = vshrl.u32 %v745, 7
    %v747 = vsub.s32 %v744, %v746
    %v748 = vrot.slane %v708, %v747
    %v749 = vcombine.high %v748, %v748
    %752 = vmatprep.subr.mxu0 0.0
    %753 = vmatpush1.msra.mxu0 %v709
    %754 = vmatprep.subr.mxu0 0.0
    %755 = vmatpush1.msra.mxu0 %v710
    %756 = vmatprep.subr.mxu0 0.0
    %757 = vmatpush1.msra.mxu0 %v711
    %758 = vmatprep.subr.mxu0 0.0
    %759 = vmatpush1.msra.mxu0 %v712
    %760 = vmatprep.subr.mxu0 0.0
    %761 = vmatpush1.msra.mxu0 %v713
    %762 = vmatprep.subr.mxu0 0.0
    %763 = vmatpush1.msra.mxu0 %v714
    %764 = vmatprep.subr.mxu0 0.0
    %765 = vmatpush1.msra.mxu0 %v715
    %766 = vmatprep.subr.mxu0 0.0
    %767 = vmatpush1.msra.mxu0 %v716
    %768 = vmatprep.subr.mxu0 0.0
    %769 = vmatpush1.msra.mxu0 %v717
    %770 = vmatprep.subr.mxu0 0.0
    %771 = vmatpush1.msra.mxu0 %v718
    %772 = vmatprep.subr.mxu0 0.0
    %773 = vmatpush1.msra.mxu0 %v719
    %774 = vmatprep.subr.mxu0 0.0
    %775 = vmatpush1.msra.mxu0 %v720
    %776 = vmatprep.subr.mxu0 0.0
    %777 = vmatpush1.msra.mxu0 %v721
    %778 = vmatprep.subr.mxu0 0.0
    %779 = vmatpush1.msra.mxu0 %v722
    %780 = vmatprep.subr.mxu0 0.0
    %781 = vmatpush1.msra.mxu0 %v723
    %782 = vmatprep.subr.mxu0 0.0
    %783 = vmatpush1.msra.mxu0 %v724
    %784 = vmatprep.subr.mxu0 0.0
    %785 = vmatpush1.msra.mxu0 %v725
    %786 = vmatprep.subr.mxu0 0.0
    %787 = vmatpush1.msra.mxu0 %v726
    %788 = vmatprep.subr.mxu0 0.0
    %789 = vmatpush1.msra.mxu0 %v727
    %790 = vmatprep.subr.mxu0 0.0
    %791 = vmatpush1.msra.mxu0 %v728
    %792 = vmatprep.subr.mxu0 0.0
    %793 = vmatpush1.msra.mxu0 %v729
    %794 = vmatprep.subr.mxu0 0.0
    %795 = vmatpush1.msra.mxu0 %v730
    %796 = vmatprep.subr.mxu0 0.0
    %797 = vmatpush1.msra.mxu0 %v731
    %798 = vmatprep.subr.mxu0 0.0
    %799 = vmatpush1.msra.mxu0 %v732
    %800 = vmatprep.subr.mxu0 0.0
    %801 = vmatpush1.msra.mxu0 %v733
    %802 = vmatprep.subr.mxu0 0.0
    %803 = vmatpush1.msra.mxu0 %v734
    %804 = vmatprep.subr.mxu0 0.0
    %805 = vmatpush1.msra.mxu0 %v735
    %806 = vmatprep.subr.mxu0 0.0
    %807 = vmatpush1.msra.mxu0 %v736
    %808 = vmatprep.subr.mxu0 0.0
    %809 = vmatpush1.msra.mxu0 %v737
    %810 = vmatprep.subr.mxu0 0.0
    %811 = vmatpush1.msra.mxu0 %v738
    %812 = vmatprep.subr.mxu0 0.0
    %813 = vmatpush1.msra.mxu0 %v739
    %814 = vmatprep.subr.mxu0 0.0
    %815 = vmatpush1.msra.mxu0 %v740
    %816 = vmatprep.mubr.f32.mxu0 %v749
    %817 = vmatmul.mubr.f32.gmra.mrb[0].mxu0 %v748
    %v818 = vpop.f32.mrb[0].mxu0
    %v819 = vadd.f32 %v197, %v818
    %v820 = vpop.f32.mrb[0].mxu0
    %821 = vdwg.mxu0
    %v822 = vtanh.pop %v819
    %823 = vst [vmem:[#allocation2 + $0x2] sm:$0x3] %v822
    %824 = vst [vmem:[%s616] sm:$0x3] %v822
    %s825 = scalar_lea.vmem [#allocation3], 6
    %v826 = vld [vmem:[%s825] sm:$0x3]
    %v827 = vld [vmem:[#allocation2] sm:$0x3]
    %v828 = vld [vmem:[#allocation5] sm:$0xff]
    %v829 = vld [vmem:[#allocation5 + $0x8] sm:$0xff]
    %v830 = vld [vmem:[#allocation5 + $0x10] sm:$0xff]
    %v831 = vld [vmem:[#allocation5 + $0x18] sm:$0xff]
    %v832 = vld [vmem:[#allocation5 + $0x20] sm:$0xff]
    %v833 = vld [vmem:[#allocation5 + $0x28] sm:$0xff]
    %v834 = vld [vmem:[#allocation5 + $0x30] sm:$0xff]
    %v835 = vld [vmem:[#allocation5 + $0x38] sm:$0xff]
    %v836 = vld [vmem:[#allocation5 + $0x40] sm:$0xff]
    %v837 = vld [vmem:[#allocation5 + $0x48] sm:$0xff]
    %v838 = vld [vmem:[#allocation5 + $0x50] sm:$0xff]
    %v839 = vld [vmem:[#allocation5 + $0x58] sm:$0xff]
    %v840 = vld [vmem:[#allocation5 + $0x60] sm:$0xff]
    %v841 = vld [vmem:[#allocation5 + $0x68] sm:$0xff]
    %v842 = vld [vmem:[#allocation5 + $0x70] sm:$0xff]
    %v843 = vld [vmem:[#allocation5 + $0x78] sm:$0xff]
    %844 = vmatprep.subr.mxu0 0.0
    %845 = vmatpush1.msra.mxu0 %v828
    %846 = vmatprep.subr.mxu0 0.0
    %847 = vmatpush1.msra.mxu0 %v829
    %848 = vmatprep.subr.mxu0 0.0
    %849 = vmatpush1.msra.mxu0 %v830
    %850 = vmatprep.subr.mxu0 0.0
    %851 = vmatpush1.msra.mxu0 %v831
    %852 = vmatprep.subr.mxu0 0.0
    %853 = vmatpush1.msra.mxu0 %v832
    %854 = vmatprep.subr.mxu0 0.0
    %855 = vmatpush1.msra.mxu0 %v833
    %856 = vmatprep.subr.mxu0 0.0
    %857 = vmatpush1.msra.mxu0 %v834
    %858 = vmatprep.subr.mxu0 0.0
    %859 = vmatpush1.msra.mxu0 %v835
    %860 = vmatprep.subr.mxu0 0.0
    %861 = vmatpush1.msra.mxu0 %v836
    %862 = vmatprep.subr.mxu0 0.0
    %863 = vmatpush1.msra.mxu0 %v837
    %864 = vmatprep.subr.mxu0 0.0
    %865 = vmatpush1.msra.mxu0 %v838
    %866 = vmatprep.subr.mxu0 0.0
    %867 = vmatpush1.msra.mxu0 %v839
    %868 = vmatprep.subr.mxu0 0.0
    %869 = vmatpush1.msra.mxu0 %v840
    %870 = vmatprep.subr.mxu0 0.0
    %871 = vmatpush1.msra.mxu0 %v841
    %872 = vmatprep.subr.mxu0 0.0
    %873 = vmatpush1.msra.mxu0 %v842
    %874 = vmatprep.subr.mxu0 0.0
    %875 = vmatpush1.msra.mxu0 %v843
    %876 = vmatprep.subr.mxu0 0.0
    %877 = vmatpush1.msra.mxu0 0.0
    %878 = vmatprep.subr.mxu0 0.0
    %879 = vmatpush1.msra.mxu0 0.0
    %880 = vmatprep.subr.mxu0 0.0
    %881 = vmatpush1.msra.mxu0 0.0
    %882 = vmatprep.subr.mxu0 0.0
    %883 = vmatpush1.msra.mxu0 0.0
    %884 = vmatprep.subr.mxu0 0.0
    %885 = vmatpush1.msra.mxu0 0.0
    %886 = vmatprep.subr.mxu0 0.0
    %887 = vmatpush1.msra.mxu0 0.0
    %888 = vmatprep.subr.mxu0 0.0
    %889 = vmatpush1.msra.mxu0 0.0
    %890 = vmatprep.subr.mxu0 0.0
    %891 = vmatpush1.msra.mxu0 0.0
    %892 = vmatprep.subr.mxu0 0.0
    %893 = vmatpush1.msra.mxu0 0.0
    %894 = vmatprep.subr.mxu0 0.0
    %895 = vmatpush1.msra.mxu0 0.0
    %896 = vmatprep.subr.mxu0 0.0
    %897 = vmatpush1.msra.mxu0 0.0
    %898 = vmatprep.subr.mxu0 0.0
    %899 = vmatpush1.msra.mxu0 0.0
    %900 = vmatprep.subr.mxu0 0.0
    %901 = vmatpush1.msra.mxu0 0.0
    %902 = vmatprep.subr.mxu0 0.0
    %903 = vmatpush1.msra.mxu0 0.0
    %904 = vmatprep.subr.mxu0 0.0
    %905 = vmatpush1.msra.mxu0 0.0
    %906 = vmatprep.subr.mxu0 0.0
    %907 = vmatpush1.msra.mxu0 0.0
    %908 = vmatprep.mubr.f32.mxu0 0.0
    %909 = vmatmul.mubr.f32.gmra.mrb[0].mxu0 %v827
    %v910 = vpop.f32.mrb[0].mxu0
    %v911 = vadd.f32 0.0, %v910
    %v912 = vpop.f32.mrb[0].mxu0
    %913 = vdwg.mxu0
    %v914 = vadd.f32 %v826, %v911
    %v915 = vtanh.pop %v914
    %916 = vst [vmem:[#allocation2] sm:$0x3] %v915
    %v917 = vld [vmem:[#allocation2] sm:$0xf]
    %v918 = vld [vmem:[#allocation8] sm:$0xff]
    %v919 = vld [vmem:[#allocation8 + $0x8] sm:$0xff]
    %v920 = vld [vmem:[#allocation8 + $0x10] sm:$0xff]
    %v921 = vld [vmem:[#allocation8 + $0x18] sm:$0xff]
    %v922 = vld [vmem:[#allocation8 + $0x20] sm:$0xff]
    %v923 = vld [vmem:[#allocation8 + $0x28] sm:$0xff]
    %v924 = vld [vmem:[#allocation8 + $0x30] sm:$0xff]
    %v925 = vld [vmem:[#allocation8 + $0x38] sm:$0xff]
    %v926 = vld [vmem:[#allocation8 + $0x40] sm:$0xff]
    %v927 = vld [vmem:[#allocation8 + $0x48] sm:$0xff]
    %v928 = vld [vmem:[#allocation8 + $0x50] sm:$0xff]
    %v929 = vld [vmem:[#allocation8 + $0x58] sm:$0xff]
    %v930 = vld [vmem:[#allocation8 + $0x60] sm:$0xff]
    %v931 = vld [vmem:[#allocation8 + $0x68] sm:$0xff]
    %v932 = vld [vmem:[#allocation8 + $0x70] sm:$0xff]
    %v933 = vld [vmem:[#allocation8 + $0x78] sm:$0xff]
    %v934 = vld [vmem:[#allocation8 + $0x80] sm:$0xff]
    %v935 = vld [vmem:[#allocation8 + $0x88] sm:$0xff]
    %v936 = vld [vmem:[#allocation8 + $0x90] sm:$0xff]
    %v937 = vld [vmem:[#allocation8 + $0x98] sm:$0xff]
    %v938 = vld [vmem:[#allocation8 + $0xa0] sm:$0xff]
    %v939 = vld [vmem:[#allocation8 + $0xa8] sm:$0xff]
    %v940 = vld [vmem:[#allocation8 + $0xb0] sm:$0xff]
    %v941 = vld [vmem:[#allocation8 + $0xb8] sm:$0xff]
    %v942 = vld [vmem:[#allocation8 + $0xc0] sm:$0xff]
    %v943 = vld [vmem:[#allocation8 + $0xc8] sm:$0xff]
    %v944 = vld [vmem:[#allocation8 + $0xd0] sm:$0xff]
    %v945 = vld [vmem:[#allocation8 + $0xd8] sm:$0xff]
    %v946 = vld [vmem:[#allocation8 + $0xe0] sm:$0xff]
    %v947 = vld [vmem:[#allocation8 + $0xe8] sm:$0xff]
    %v948 = vld [vmem:[#allocation8 + $0xf0] sm:$0xff]
    %v949 = vld [vmem:[#allocation8 + $0xf8] sm:$0xff]
    %v952 = vunpack.c.l.s4 1983009808
    %v953 = vunpack.c.0.s8 %v952
    %v954 = vlaneseq
    %v955 = vshrl.u32 %v954, 7
    %v956 = vsub.s32 %v953, %v955
    %v957 = vrot.slane %v917, %v956
    %v958 = vcombine.high %v957, %v957
    %961 = vmatprep.subr.mxu0 0.0
    %962 = vmatpush1.msra.mxu0 %v918
    %963 = vmatprep.subr.mxu0 0.0
    %964 = vmatpush1.msra.mxu0 %v919
    %965 = vmatprep.subr.mxu0 0.0
    %966 = vmatpush1.msra.mxu0 %v920
    %967 = vmatprep.subr.mxu0 0.0
    %968 = vmatpush1.msra.mxu0 %v921
    %969 = vmatprep.subr.mxu0 0.0
    %970 = vmatpush1.msra.mxu0 %v922
    %971 = vmatprep.subr.mxu0 0.0
    %972 = vmatpush1.msra.mxu0 %v923
    %973 = vmatprep.subr.mxu0 0.0
    %974 = vmatpush1.msra.mxu0 %v924
    %975 = vmatprep.subr.mxu0 0.0
    %976 = vmatpush1.msra.mxu0 %v925
    %977 = vmatprep.subr.mxu0 0.0
    %978 = vmatpush1.msra.mxu0 %v926
    %979 = vmatprep.subr.mxu0 0.0
    %980 = vmatpush1.msra.mxu0 %v927
    %981 = vmatprep.subr.mxu0 0.0
    %982 = vmatpush1.msra.mxu0 %v928
    %983 = vmatprep.subr.mxu0 0.0
    %984 = vmatpush1.msra.mxu0 %v929
    %985 = vmatprep.subr.mxu0 0.0
    %986 = vmatpush1.msra.mxu0 %v930
    %987 = vmatprep.subr.mxu0 0.0
    %988 = vmatpush1.msra.mxu0 %v931
    %989 = vmatprep.subr.mxu0 0.0
    %990 = vmatpush1.msra.mxu0 %v932
    %991 = vmatprep.subr.mxu0 0.0
    %992 = vmatpush1.msra.mxu0 %v933
    %993 = vmatprep.subr.mxu0 0.0
    %994 = vmatpush1.msra.mxu0 %v934
    %995 = vmatprep.subr.mxu0 0.0
    %996 = vmatpush1.msra.mxu0 %v935
    %997 = vmatprep.subr.mxu0 0.0
    %998 = vmatpush1.msra.mxu0 %v936
    %999 = vmatprep.subr.mxu0 0.0
    %1000 = vmatpush1.msra.mxu0 %v937
    %1001 = vmatprep.subr.mxu0 0.0
    %1002 = vmatpush1.msra.mxu0 %v938
    %1003 = vmatprep.subr.mxu0 0.0
    %1004 = vmatpush1.msra.mxu0 %v939
    %1005 = vmatprep.subr.mxu0 0.0
    %1006 = vmatpush1.msra.mxu0 %v940
    %1007 = vmatprep.subr.mxu0 0.0
    %1008 = vmatpush1.msra.mxu0 %v941
    %1009 = vmatprep.subr.mxu0 0.0
    %1010 = vmatpush1.msra.mxu0 %v942
    %1011 = vmatprep.subr.mxu0 0.0
    %1012 = vmatpush1.msra.mxu0 %v943
    %1013 = vmatprep.subr.mxu0 0.0
    %1014 = vmatpush1.msra.mxu0 %v944
    %1015 = vmatprep.subr.mxu0 0.0
    %1016 = vmatpush1.msra.mxu0 %v945
    %1017 = vmatprep.subr.mxu0 0.0
    %1018 = vmatpush1.msra.mxu0 %v946
    %1019 = vmatprep.subr.mxu0 0.0
    %1020 = vmatpush1.msra.mxu0 %v947
    %1021 = vmatprep.subr.mxu0 0.0
    %1022 = vmatpush1.msra.mxu0 %v948
    %1023 = vmatprep.subr.mxu0 0.0
    %1024 = vmatpush1.msra.mxu0 %v949
    %1025 = vmatprep.mubr.f32.mxu0 %v958
    %1026 = vmatmul.mubr.f32.gmra.mrb[0].mxu0 %v957
    %v1027 = vpop.f32.mrb[0].mxu0
    %v1028 = vadd.f32 %v197, %v1027
    %v1029 = vpop.f32.mrb[0].mxu0
    %1030 = vdwg.mxu0
    %v1031 = vtanh.pop %v1028
    %1032 = vst [vmem:[#allocation2 + $0x2] sm:$0x3] %v1031
    %1033 = vst [vmem:[%s825] sm:$0x3] %v1031
    %s1034 = scalar_lea.vmem [#allocation3], 8
    %v1035 = vld [vmem:[%s1034] sm:$0x3]
    %v1036 = vld [vmem:[#allocation2] sm:$0x3]
    %v1037 = vld [vmem:[#allocation5] sm:$0xff]
    %v1038 = vld [vmem:[#allocation5 + $0x8] sm:$0xff]
    %v1039 = vld [vmem:[#allocation5 + $0x10] sm:$0xff]
    %v1040 = vld [vmem:[#allocation5 + $0x18] sm:$0xff]
    %v1041 = vld [vmem:[#allocation5 + $0x20] sm:$0xff]
    %v1042 = vld [vmem:[#allocation5 + $0x28] sm:$0xff]
    %v1043 = vld [vmem:[#allocation5 + $0x30] sm:$0xff]
    %v1044 = vld [vmem:[#allocation5 + $0x38] sm:$0xff]
    %v1045 = vld [vmem:[#allocation5 + $0x40] sm:$0xff]
    %v1046 = vld [vmem:[#allocation5 + $0x48] sm:$0xff]
    %v1047 = vld [vmem:[#allocation5 + $0x50] sm:$0xff]
    %v1048 = vld [vmem:[#allocation5 + $0x58] sm:$0xff]
    %v1049 = vld [vmem:[#allocation5 + $0x60] sm:$0xff]
    %v1050 = vld [vmem:[#allocation5 + $0x68] sm:$0xff]
    %v1051 = vld [vmem:[#allocation5 + $0x70] sm:$0xff]
    %v1052 = vld [vmem:[#allocation5 + $0x78] sm:$0xff]
    %1053 = vmatprep.subr.mxu0 0.0
    %1054 = vmatpush1.msra.mxu0 %v1037
    %1055 = vmatprep.subr.mxu0 0.0
    %1056 = vmatpush1.msra.mxu0 %v1038
    %1057 = vmatprep.subr.mxu0 0.0
    %1058 = vmatpush1.msra.mxu0 %v1039
    %1059 = vmatprep.subr.mxu0 0.0
    %1060 = vmatpush1.msra.mxu0 %v1040
    %1061 = vmatprep.subr.mxu0 0.0
    %1062 = vmatpush1.msra.mxu0 %v1041
    %1063 = vmatprep.subr.mxu0 0.0
    %1064 = vmatpush1.msra.mxu0 %v1042
    %1065 = vmatprep.subr.mxu0 0.0
    %1066 = vmatpush1.msra.mxu0 %v1043
    %1067 = vmatprep.subr.mxu0 0.0
    %1068 = vmatpush1.msra.mxu0 %v1044
    %1069 = vmatprep.subr.mxu0 0.0
    %1070 = vmatpush1.msra.mxu0 %v1045
    %1071 = vmatprep.subr.mxu0 0.0
    %1072 = vmatpush1.msra.mxu0 %v1046
    %1073 = vmatprep.subr.mxu0 0.0
    %1074 = vmatpush1.msra.mxu0 %v1047
    %1075 = vmatprep.subr.mxu0 0.0
    %1076 = vmatpush1.msra.mxu0 %v1048
    %1077 = vmatprep.subr.mxu0 0.0
    %1078 = vmatpush1.msra.mxu0 %v1049
    %1079 = vmatprep.subr.mxu0 0.0
    %1080 = vmatpush1.msra.mxu0 %v1050
    %1081 = vmatprep.subr.mxu0 0.0
    %1082 = vmatpush1.msra.mxu0 %v1051
    %1083 = vmatprep.subr.mxu0 0.0
    %1084 = vmatpush1.msra.mxu0 %v1052
    %1085 = vmatprep.subr.mxu0 0.0
    %1086 = vmatpush1.msra.mxu0 0.0
    %1087 = vmatprep.subr.mxu0 0.0
    %1088 = vmatpush1.msra.mxu0 0.0
    %1089 = vmatprep.subr.mxu0 0.0
    %1090 = vmatpush1.msra.mxu0 0.0
    %1091 = vmatprep.subr.mxu0 0.0
    %1092 = vmatpush1.msra.mxu0 0.0
    %1093 = vmatprep.subr.mxu0 0.0
    %1094 = vmatpush1.msra.mxu0 0.0
    %1095 = vmatprep.subr.mxu0 0.0
    %1096 = vmatpush1.msra.mxu0 0.0
    %1097 = vmatprep.subr.mxu0 0.0
    %1098 = vmatpush1.msra.mxu0 0.0
    %1099 = vmatprep.subr.mxu0 0.0
    %1100 = vmatpush1.msra.mxu0 0.0
    %1101 = vmatprep.subr.mxu0 0.0
    %1102 = vmatpush1.msra.mxu0 0.0
    %1103 = vmatprep.subr.mxu0 0.0
    %1104 = vmatpush1.msra.mxu0 0.0
    %1105 = vmatprep.subr.mxu0 0.0
    %1106 = vmatpush1.msra.mxu0 0.0
    %1107 = vmatprep.subr.mxu0 0.0
    %1108 = vmatpush1.msra.mxu0 0.0
    %1109 = vmatprep.subr.mxu0 0.0
    %1110 = vmatpush1.msra.mxu0 0.0
    %1111 = vmatprep.subr.mxu0 0.0
    %1112 = vmatpush1.msra.mxu0 0.0
    %1113 = vmatprep.subr.mxu0 0.0
    %1114 = vmatpush1.msra.mxu0 0.0
    %1115 = vmatprep.subr.mxu0 0.0
    %1116 = vmatpush1.msra.mxu0 0.0
    %1117 = vmatprep.mubr.f32.mxu0 0.0
    %1118 = vmatmul.mubr.f32.gmra.mrb[0].mxu0 %v1036
    %v1119 = vpop.f32.mrb[0].mxu0
    %v1120 = vadd.f32 0.0, %v1119
    %v1121 = vpop.f32.mrb[0].mxu0
    %1122 = vdwg.mxu0
    %v1123 = vadd.f32 %v1035, %v1120
    %v1124 = vtanh.pop %v1123
    %1125 = vst [vmem:[#allocation2] sm:$0x3] %v1124
    %v1126 = vld [vmem:[#allocation2] sm:$0xf]
    %v1127 = vld [vmem:[#allocation8] sm:$0xff]
    %v1128 = vld [vmem:[#allocation8 + $0x8] sm:$0xff]
    %v1129 = vld [vmem:[#allocation8 + $0x10] sm:$0xff]
    %v1130 = vld [vmem:[#allocation8 + $0x18] sm:$0xff]
    %v1131 = vld [vmem:[#allocation8 + $0x20] sm:$0xff]
    %v1132 = vld [vmem:[#allocation8 + $0x28] sm:$0xff]
    %v1133 = vld [vmem:[#allocation8 + $0x30] sm:$0xff]
    %v1134 = vld [vmem:[#allocation8 + $0x38] sm:$0xff]
    %v1135 = vld [vmem:[#allocation8 + $0x40] sm:$0xff]
    %v1136 = vld [vmem:[#allocation8 + $0x48] sm:$0xff]
    %v1137 = vld [vmem:[#allocation8 + $0x50] sm:$0xff]
    %v1138 = vld [vmem:[#allocation8 + $0x58] sm:$0xff]
    %v1139 = vld [vmem:[#allocation8 + $0x60] sm:$0xff]
    %v1140 = vld [vmem:[#allocation8 + $0x68] sm:$0xff]
    %v1141 = vld [vmem:[#allocation8 + $0x70] sm:$0xff]
    %v1142 = vld [vmem:[#allocation8 + $0x78] sm:$0xff]
    %v1143 = vld [vmem:[#allocation8 + $0x80] sm:$0xff]
    %v1144 = vld [vmem:[#allocation8 + $0x88] sm:$0xff]
    %v1145 = vld [vmem:[#allocation8 + $0x90] sm:$0xff]
    %v1146 = vld [vmem:[#allocation8 + $0x98] sm:$0xff]
    %v1147 = vld [vmem:[#allocation8 + $0xa0] sm:$0xff]
    %v1148 = vld [vmem:[#allocation8 + $0xa8] sm:$0xff]
    %v1149 = vld [vmem:[#allocation8 + $0xb0] sm:$0xff]
    %v1150 = vld [vmem:[#allocation8 + $0xb8] sm:$0xff]
    %v1151 = vld [vmem:[#allocation8 + $0xc0] sm:$0xff]
    %v1152 = vld [vmem:[#allocation8 + $0xc8] sm:$0xff]
    %v1153 = vld [vmem:[#allocation8 + $0xd0] sm:$0xff]
    %v1154 = vld [vmem:[#allocation8 + $0xd8] sm:$0xff]
    %v1155 = vld [vmem:[#allocation8 + $0xe0] sm:$0xff]
    %v1156 = vld [vmem:[#allocation8 + $0xe8] sm:$0xff]
    %v1157 = vld [vmem:[#allocation8 + $0xf0] sm:$0xff]
    %v1158 = vld [vmem:[#allocation8 + $0xf8] sm:$0xff]
    %v1161 = vunpack.c.l.s4 1983009808
    %v1162 = vunpack.c.0.s8 %v1161
    %v1163 = vlaneseq
    %v1164 = vshrl.u32 %v1163, 7
    %v1165 = vsub.s32 %v1162, %v1164
    %v1166 = vrot.slane %v1126, %v1165
    %v1167 = vcombine.high %v1166, %v1166
    %1170 = vmatprep.subr.mxu0 0.0
    %1171 = vmatpush1.msra.mxu0 %v1127
    %1172 = vmatprep.subr.mxu0 0.0
    %1173 = vmatpush1.msra.mxu0 %v1128
    %1174 = vmatprep.subr.mxu0 0.0
    %1175 = vmatpush1.msra.mxu0 %v1129
    %1176 = vmatprep.subr.mxu0 0.0
    %1177 = vmatpush1.msra.mxu0 %v1130
    %1178 = vmatprep.subr.mxu0 0.0
    %1179 = vmatpush1.msra.mxu0 %v1131
    %1180 = vmatprep.subr.mxu0 0.0
    %1181 = vmatpush1.msra.mxu0 %v1132
    %1182 = vmatprep.subr.mxu0 0.0
    %1183 = vmatpush1.msra.mxu0 %v1133
    %1184 = vmatprep.subr.mxu0 0.0
    %1185 = vmatpush1.msra.mxu0 %v1134
    %1186 = vmatprep.subr.mxu0 0.0
    %1187 = vmatpush1.msra.mxu0 %v1135
    %1188 = vmatprep.subr.mxu0 0.0
    %1189 = vmatpush1.msra.mxu0 %v1136
    %1190 = vmatprep.subr.mxu0 0.0
    %1191 = vmatpush1.msra.mxu0 %v1137
    %1192 = vmatprep.subr.mxu0 0.0
    %1193 = vmatpush1.msra.mxu0 %v1138
    %1194 = vmatprep.subr.mxu0 0.0
    %1195 = vmatpush1.msra.mxu0 %v1139
    %1196 = vmatprep.subr.mxu0 0.0
    %1197 = vmatpush1.msra.mxu0 %v1140
    %1198 = vmatprep.subr.mxu0 0.0
    %1199 = vmatpush1.msra.mxu0 %v1141
    %1200 = vmatprep.subr.mxu0 0.0
    %1201 = vmatpush1.msra.mxu0 %v1142
    %1202 = vmatprep.subr.mxu0 0.0
    %1203 = vmatpush1.msra.mxu0 %v1143
    %1204 = vmatprep.subr.mxu0 0.0
    %1205 = vmatpush1.msra.mxu0 %v1144
    %1206 = vmatprep.subr.mxu0 0.0
    %1207 = vmatpush1.msra.mxu0 %v1145
    %1208 = vmatprep.subr.mxu0 0.0
    %1209 = vmatpush1.msra.mxu0 %v1146
    %1210 = vmatprep.subr.mxu0 0.0
    %1211 = vmatpush1.msra.mxu0 %v1147
    %1212 = vmatprep.subr.mxu0 0.0
    %1213 = vmatpush1.msra.mxu0 %v1148
    %1214 = vmatprep.subr.mxu0 0.0
    %1215 = vmatpush1.msra.mxu0 %v1149
    %1216 = vmatprep.subr.mxu0 0.0
    %1217 = vmatpush1.msra.mxu0 %v1150
    %1218 = vmatprep.subr.mxu0 0.0
    %1219 = vmatpush1.msra.mxu0 %v1151
    %1220 = vmatprep.subr.mxu0 0.0
    %1221 = vmatpush1.msra.mxu0 %v1152
    %1222 = vmatprep.subr.mxu0 0.0
    %1223 = vmatpush1.msra.mxu0 %v1153
    %1224 = vmatprep.subr.mxu0 0.0
    %1225 = vmatpush1.msra.mxu0 %v1154
    %1226 = vmatprep.subr.mxu0 0.0
    %1227 = vmatpush1.msra.mxu0 %v1155
    %1228 = vmatprep.subr.mxu0 0.0
    %1229 = vmatpush1.msra.mxu0 %v1156
    %1230 = vmatprep.subr.mxu0 0.0
    %1231 = vmatpush1.msra.mxu0 %v1157
    %1232 = vmatprep.subr.mxu0 0.0
    %1233 = vmatpush1.msra.mxu0 %v1158
    %1234 = vmatprep.mubr.f32.mxu0 %v1167
    %1235 = vmatmul.mubr.f32.gmra.mrb[0].mxu0 %v1166
    %v1236 = vpop.f32.mrb[0].mxu0
    %v1237 = vadd.f32 %v197, %v1236
    %v1238 = vpop.f32.mrb[0].mxu0
    %1239 = vdwg.mxu0
    %v1240 = vtanh.pop %v1237
    %1241 = vst [vmem:[#allocation2 + $0x2] sm:$0x3] %v1240
    %1242 = vst [vmem:[%s1034] sm:$0x3] %v1240
    %s1243 = scalar_lea.vmem [#allocation3], 10
    %v1244 = vld [vmem:[%s1243] sm:$0x3]
    %v1245 = vld [vmem:[#allocation2] sm:$0x3]
    %v1246 = vld [vmem:[#allocation5] sm:$0xff]
    %v1247 = vld [vmem:[#allocation5 + $0x8] sm:$0xff]
    %v1248 = vld [vmem:[#allocation5 + $0x10] sm:$0xff]
    %v1249 = vld [vmem:[#allocation5 + $0x18] sm:$0xff]
    %v1250 = vld [vmem:[#allocation5 + $0x20] sm:$0xff]
    %v1251 = vld [vmem:[#allocation5 + $0x28] sm:$0xff]
    %v1252 = vld [vmem:[#allocation5 + $0x30] sm:$0xff]
    %v1253 = vld [vmem:[#allocation5 + $0x38] sm:$0xff]
    %v1254 = vld [vmem:[#allocation5 + $0x40] sm:$0xff]
    %v1255 = vld [vmem:[#allocation5 + $0x48] sm:$0xff]
    %v1256 = vld [vmem:[#allocation5 + $0x50] sm:$0xff]
    %v1257 = vld [vmem:[#allocation5 + $0x58] sm:$0xff]
    %v1258 = vld [vmem:[#allocation5 + $0x60] sm:$0xff]
    %v1259 = vld [vmem:[#allocation5 + $0x68] sm:$0xff]
    %v1260 = vld [vmem:[#allocation5 + $0x70] sm:$0xff]
    %v1261 = vld [vmem:[#allocation5 + $0x78] sm:$0xff]
    %1262 = vmatprep.subr.mxu0 0.0
    %1263 = vmatpush1.msra.mxu0 %v1246
    %1264 = vmatprep.subr.mxu0 0.0
    %1265 = vmatpush1.msra.mxu0 %v1247
    %1266 = vmatprep.subr.mxu0 0.0
    %1267 = vmatpush1.msra.mxu0 %v1248
    %1268 = vmatprep.subr.mxu0 0.0
    %1269 = vmatpush1.msra.mxu0 %v1249
    %1270 = vmatprep.subr.mxu0 0.0
    %1271 = vmatpush1.msra.mxu0 %v1250
    %1272 = vmatprep.subr.mxu0 0.0
    %1273 = vmatpush1.msra.mxu0 %v1251
    %1274 = vmatprep.subr.mxu0 0.0
    %1275 = vmatpush1.msra.mxu0 %v1252
    %1276 = vmatprep.subr.mxu0 0.0
    %1277 = vmatpush1.msra.mxu0 %v1253
    %1278 = vmatprep.subr.mxu0 0.0
    %1279 = vmatpush1.msra.mxu0 %v1254
    %1280 = vmatprep.subr.mxu0 0.0
    %1281 = vmatpush1.msra.mxu0 %v1255
    %1282 = vmatprep.subr.mxu0 0.0
    %1283 = vmatpush1.msra.mxu0 %v1256
    %1284 = vmatprep.subr.mxu0 0.0
    %1285 = vmatpush1.msra.mxu0 %v1257
    %1286 = vmatprep.subr.mxu0 0.0
    %1287 = vmatpush1.msra.mxu0 %v1258
    %1288 = vmatprep.subr.mxu0 0.0
    %1289 = vmatpush1.msra.mxu0 %v1259
    %1290 = vmatprep.subr.mxu0 0.0
    %1291 = vmatpush1.msra.mxu0 %v1260
    %1292 = vmatprep.subr.mxu0 0.0
    %1293 = vmatpush1.msra.mxu0 %v1261
    %1294 = vmatprep.subr.mxu0 0.0
    %1295 = vmatpush1.msra.mxu0 0.0
    %1296 = vmatprep.subr.mxu0 0.0
    %1297 = vmatpush1.msra.mxu0 0.0
    %1298 = vmatprep.subr.mxu0 0.0
    %1299 = vmatpush1.msra.mxu0 0.0
    %1300 = vmatprep.subr.mxu0 0.0
    %1301 = vmatpush1.msra.mxu0 0.0
    %1302 = vmatprep.subr.mxu0 0.0
    %1303 = vmatpush1.msra.mxu0 0.0
    %1304 = vmatprep.subr.mxu0 0.0
    %1305 = vmatpush1.msra.mxu0 0.0
    %1306 = vmatprep.subr.mxu0 0.0
    %1307 = vmatpush1.msra.mxu0 0.0
    %1308 = vmatprep.subr.mxu0 0.0
    %1309 = vmatpush1.msra.mxu0 0.0
    %1310 = vmatprep.subr.mxu0 0.0
    %1311 = vmatpush1.msra.mxu0 0.0
    %1312 = vmatprep.subr.mxu0 0.0
    %1313 = vmatpush1.msra.mxu0 0.0
    %1314 = vmatprep.subr.mxu0 0.0
    %1315 = vmatpush1.msra.mxu0 0.0
    %1316 = vmatprep.subr.mxu0 0.0
    %1317 = vmatpush1.msra.mxu0 0.0
    %1318 = vmatprep.subr.mxu0 0.0
    %1319 = vmatpush1.msra.mxu0 0.0
    %1320 = vmatprep.subr.mxu0 0.0
    %1321 = vmatpush1.msra.mxu0 0.0
    %1322 = vmatprep.subr.mxu0 0.0
    %1323 = vmatpush1.msra.mxu0 0.0
    %1324 = vmatprep.subr.mxu0 0.0
    %1325 = vmatpush1.msra.mxu0 0.0
    %1326 = vmatprep.mubr.f32.mxu0 0.0
    %1327 = vmatmul.mubr.f32.gmra.mrb[0].mxu0 %v1245
    %v1328 = vpop.f32.mrb[0].mxu0
    %v1329 = vadd.f32 0.0, %v1328
    %v1330 = vpop.f32.mrb[0].mxu0
    %1331 = vdwg.mxu0
    %v1332 = vadd.f32 %v1244, %v1329
    %v1333 = vtanh.pop %v1332
    %1334 = vst [vmem:[#allocation2] sm:$0x3] %v1333
    %v1335 = vld [vmem:[#allocation2] sm:$0xf]
    %v1336 = vld [vmem:[#allocation8] sm:$0xff]
    %v1337 = vld [vmem:[#allocation8 + $0x8] sm:$0xff]
    %v1338 = vld [vmem:[#allocation8 + $0x10] sm:$0xff]
    %v1339 = vld [vmem:[#allocation8 + $0x18] sm:$0xff]
    %v1340 = vld [vmem:[#allocation8 + $0x20] sm:$0xff]
    %v1341 = vld [vmem:[#allocation8 + $0x28] sm:$0xff]
    %v1342 = vld [vmem:[#allocation8 + $0x30] sm:$0xff]
    %v1343 = vld [vmem:[#allocation8 + $0x38] sm:$0xff]
    %v1344 = vld [vmem:[#allocation8 + $0x40] sm:$0xff]
    %v1345 = vld [vmem:[#allocation8 + $0x48] sm:$0xff]
    %v1346 = vld [vmem:[#allocation8 + $0x50] sm:$0xff]
    %v1347 = vld [vmem:[#allocation8 + $0x58] sm:$0xff]
    %v1348 = vld [vmem:[#allocation8 + $0x60] sm:$0xff]
    %v1349 = vld [vmem:[#allocation8 + $0x68] sm:$0xff]
    %v1350 = vld [vmem:[#allocation8 + $0x70] sm:$0xff]
    %v1351 = vld [vmem:[#allocation8 + $0x78] sm:$0xff]
    %v1352 = vld [vmem:[#allocation8 + $0x80] sm:$0xff]
    %v1353 = vld [vmem:[#allocation8 + $0x88] sm:$0xff]
    %v1354 = vld [vmem:[#allocation8 + $0x90] sm:$0xff]
    %v1355 = vld [vmem:[#allocation8 + $0x98] sm:$0xff]
    %v1356 = vld [vmem:[#allocation8 + $0xa0] sm:$0xff]
    %v1357 = vld [vmem:[#allocation8 + $0xa8] sm:$0xff]
    %v1358 = vld [vmem:[#allocation8 + $0xb0] sm:$0xff]
    %v1359 = vld [vmem:[#allocation8 + $0xb8] sm:$0xff]
    %v1360 = vld [vmem:[#allocation8 + $0xc0] sm:$0xff]
    %v1361 = vld [vmem:[#allocation8 + $0xc8] sm:$0xff]
    %v1362 = vld [vmem:[#allocation8 + $0xd0] sm:$0xff]
    %v1363 = vld [vmem:[#allocation8 + $0xd8] sm:$0xff]
    %v1364 = vld [vmem:[#allocation8 + $0xe0] sm:$0xff]
    %v1365 = vld [vmem:[#allocation8 + $0xe8] sm:$0xff]
    %v1366 = vld [vmem:[#allocation8 + $0xf0] sm:$0xff]
    %v1367 = vld [vmem:[#allocation8 + $0xf8] sm:$0xff]
    %v1370 = vunpack.c.l.s4 1983009808
    %v1371 = vunpack.c.0.s8 %v1370
    %v1372 = vlaneseq
    %v1373 = vshrl.u32 %v1372, 7
    %v1374 = vsub.s32 %v1371, %v1373
    %v1375 = vrot.slane %v1335, %v1374
    %v1376 = vcombine.high %v1375, %v1375
    %1379 = vmatprep.subr.mxu0 0.0
    %1380 = vmatpush1.msra.mxu0 %v1336
    %1381 = vmatprep.subr.mxu0 0.0
    %1382 = vmatpush1.msra.mxu0 %v1337
    %1383 = vmatprep.subr.mxu0 0.0
    %1384 = vmatpush1.msra.mxu0 %v1338
    %1385 = vmatprep.subr.mxu0 0.0
    %1386 = vmatpush1.msra.mxu0 %v1339
    %1387 = vmatprep.subr.mxu0 0.0
    %1388 = vmatpush1.msra.mxu0 %v1340
    %1389 = vmatprep.subr.mxu0 0.0
    %1390 = vmatpush1.msra.mxu0 %v1341
    %1391 = vmatprep.subr.mxu0 0.0
    %1392 = vmatpush1.msra.mxu0 %v1342
    %1393 = vmatprep.subr.mxu0 0.0
    %1394 = vmatpush1.msra.mxu0 %v1343
    %1395 = vmatprep.subr.mxu0 0.0
    %1396 = vmatpush1.msra.mxu0 %v1344
    %1397 = vmatprep.subr.mxu0 0.0
    %1398 = vmatpush1.msra.mxu0 %v1345
    %1399 = vmatprep.subr.mxu0 0.0
    %1400 = vmatpush1.msra.mxu0 %v1346
    %1401 = vmatprep.subr.mxu0 0.0
    %1402 = vmatpush1.msra.mxu0 %v1347
    %1403 = vmatprep.subr.mxu0 0.0
    %1404 = vmatpush1.msra.mxu0 %v1348
    %1405 = vmatprep.subr.mxu0 0.0
    %1406 = vmatpush1.msra.mxu0 %v1349
    %1407 = vmatprep.subr.mxu0 0.0
    %1408 = vmatpush1.msra.mxu0 %v1350
    %1409 = vmatprep.subr.mxu0 0.0
    %1410 = vmatpush1.msra.mxu0 %v1351
    %1411 = vmatprep.subr.mxu0 0.0
    %1412 = vmatpush1.msra.mxu0 %v1352
    %1413 = vmatprep.subr.mxu0 0.0
    %1414 = vmatpush1.msra.mxu0 %v1353
    %1415 = vmatprep.subr.mxu0 0.0
    %1416 = vmatpush1.msra.mxu0 %v1354
    %1417 = vmatprep.subr.mxu0 0.0
    %1418 = vmatpush1.msra.mxu0 %v1355
    %1419 = vmatprep.subr.mxu0 0.0
    %1420 = vmatpush1.msra.mxu0 %v1356
    %1421 = vmatprep.subr.mxu0 0.0
    %1422 = vmatpush1.msra.mxu0 %v1357
    %1423 = vmatprep.subr.mxu0 0.0
    %1424 = vmatpush1.msra.mxu0 %v1358
    %1425 = vmatprep.subr.mxu0 0.0
    %1426 = vmatpush1.msra.mxu0 %v1359
    %1427 = vmatprep.subr.mxu0 0.0
    %1428 = vmatpush1.msra.mxu0 %v1360
    %1429 = vmatprep.subr.mxu0 0.0
    %1430 = vmatpush1.msra.mxu0 %v1361
    %1431 = vmatprep.subr.mxu0 0.0
    %1432 = vmatpush1.msra.mxu0 %v1362
    %1433 = vmatprep.subr.mxu0 0.0
    %1434 = vmatpush1.msra.mxu0 %v1363
    %1435 = vmatprep.subr.mxu0 0.0
    %1436 = vmatpush1.msra.mxu0 %v1364
    %1437 = vmatprep.subr.mxu0 0.0
    %1438 = vmatpush1.msra.mxu0 %v1365
    %1439 = vmatprep.subr.mxu0 0.0
    %1440 = vmatpush1.msra.mxu0 %v1366
    %1441 = vmatprep.subr.mxu0 0.0
    %1442 = vmatpush1.msra.mxu0 %v1367
    %1443 = vmatprep.mubr.f32.mxu0 %v1376
    %1444 = vmatmul.mubr.f32.gmra.mrb[0].mxu0 %v1375
    %v1445 = vpop.f32.mrb[0].mxu0
    %v1446 = vadd.f32 %v197, %v1445
    %v1447 = vpop.f32.mrb[0].mxu0
    %1448 = vdwg.mxu0
    %v1449 = vtanh.pop %v1446
    %1450 = vst [vmem:[#allocation2 + $0x2] sm:$0x3] %v1449
    %1451 = vst [vmem:[%s1243] sm:$0x3] %v1449
    %s1452 = scalar_lea.vmem [#allocation3], 12
    %v1453 = vld [vmem:[%s1452] sm:$0x3]
    %v1454 = vld [vmem:[#allocation2] sm:$0x3]
    %v1455 = vld [vmem:[#allocation5] sm:$0xff]
    %v1456 = vld [vmem:[#allocation5 + $0x8] sm:$0xff]
    %v1457 = vld [vmem:[#allocation5 + $0x10] sm:$0xff]
    %v1458 = vld [vmem:[#allocation5 + $0x18] sm:$0xff]
    %v1459 = vld [vmem:[#allocation5 + $0x20] sm:$0xff]
    %v1460 = vld [vmem:[#allocation5 + $0x28] sm:$0xff]
    %v1461 = vld [vmem:[#allocation5 + $0x30] sm:$0xff]
    %v1462 = vld [vmem:[#allocation5 + $0x38] sm:$0xff]
    %v1463 = vld [vmem:[#allocation5 + $0x40] sm:$0xff]
    %v1464 = vld [vmem:[#allocation5 + $0x48] sm:$0xff]
    %v1465 = vld [vmem:[#allocation5 + $0x50] sm:$0xff]
    %v1466 = vld [vmem:[#allocation5 + $0x58] sm:$0xff]
    %v1467 = vld [vmem:[#allocation5 + $0x60] sm:$0xff]
    %v1468 = vld [vmem:[#allocation5 + $0x68] sm:$0xff]
    %v1469 = vld [vmem:[#allocation5 + $0x70] sm:$0xff]
    %v1470 = vld [vmem:[#allocation5 + $0x78] sm:$0xff]
    %1471 = vmatprep.subr.mxu0 0.0
    %1472 = vmatpush1.msra.mxu0 %v1455
    %1473 = vmatprep.subr.mxu0 0.0
    %1474 = vmatpush1.msra.mxu0 %v1456
    %1475 = vmatprep.subr.mxu0 0.0
    %1476 = vmatpush1.msra.mxu0 %v1457
    %1477 = vmatprep.subr.mxu0 0.0
    %1478 = vmatpush1.msra.mxu0 %v1458
    %1479 = vmatprep.subr.mxu0 0.0
    %1480 = vmatpush1.msra.mxu0 %v1459
    %1481 = vmatprep.subr.mxu0 0.0
    %1482 = vmatpush1.msra.mxu0 %v1460
    %1483 = vmatprep.subr.mxu0 0.0
    %1484 = vmatpush1.msra.mxu0 %v1461
    %1485 = vmatprep.subr.mxu0 0.0
    %1486 = vmatpush1.msra.mxu0 %v1462
    %1487 = vmatprep.subr.mxu0 0.0
    %1488 = vmatpush1.msra.mxu0 %v1463
    %1489 = vmatprep.subr.mxu0 0.0
    %1490 = vmatpush1.msra.mxu0 %v1464
    %1491 = vmatprep.subr.mxu0 0.0
    %1492 = vmatpush1.msra.mxu0 %v1465
    %1493 = vmatprep.subr.mxu0 0.0
    %1494 = vmatpush1.msra.mxu0 %v1466
    %1495 = vmatprep.subr.mxu0 0.0
    %1496 = vmatpush1.msra.mxu0 %v1467
    %1497 = vmatprep.subr.mxu0 0.0
    %1498 = vmatpush1.msra.mxu0 %v1468
    %1499 = vmatprep.subr.mxu0 0.0
    %1500 = vmatpush1.msra.mxu0 %v1469
    %1501 = vmatprep.subr.mxu0 0.0
    %1502 = vmatpush1.msra.mxu0 %v1470
    %1503 = vmatprep.subr.mxu0 0.0
    %1504 = vmatpush1.msra.mxu0 0.0
    %1505 = vmatprep.subr.mxu0 0.0
    %1506 = vmatpush1.msra.mxu0 0.0
    %1507 = vmatprep.subr.mxu0 0.0
    %1508 = vmatpush1.msra.mxu0 0.0
    %1509 = vmatprep.subr.mxu0 0.0
    %1510 = vmatpush1.msra.mxu0 0.0
    %1511 = vmatprep.subr.mxu0 0.0
    %1512 = vmatpush1.msra.mxu0 0.0
    %1513 = vmatprep.subr.mxu0 0.0
    %1514 = vmatpush1.msra.mxu0 0.0
    %1515 = vmatprep.subr.mxu0 0.0
    %1516 = vmatpush1.msra.mxu0 0.0
    %1517 = vmatprep.subr.mxu0 0.0
    %1518 = vmatpush1.msra.mxu0 0.0
    %1519 = vmatprep.subr.mxu0 0.0
    %1520 = vmatpush1.msra.mxu0 0.0
    %1521 = vmatprep.subr.mxu0 0.0
    %1522 = vmatpush1.msra.mxu0 0.0
    %1523 = vmatprep.subr.mxu0 0.0
    %1524 = vmatpush1.msra.mxu0 0.0
    %1525 = vmatprep.subr.mxu0 0.0
    %1526 = vmatpush1.msra.mxu0 0.0
    %1527 = vmatprep.subr.mxu0 0.0
    %1528 = vmatpush1.msra.mxu0 0.0
    %1529 = vmatprep.subr.mxu0 0.0
    %1530 = vmatpush1.msra.mxu0 0.0
    %1531 = vmatprep.subr.mxu0 0.0
    %1532 = vmatpush1.msra.mxu0 0.0
    %1533 = vmatprep.subr.mxu0 0.0
    %1534 = vmatpush1.msra.mxu0 0.0
    %1535 = vmatprep.mubr.f32.mxu0 0.0
    %1536 = vmatmul.mubr.f32.gmra.mrb[0].mxu0 %v1454
    %v1537 = vpop.f32.mrb[0].mxu0
    %v1538 = vadd.f32 0.0, %v1537
    %v1539 = vpop.f32.mrb[0].mxu0
    %1540 = vdwg.mxu0
    %v1541 = vadd.f32 %v1453, %v1538
    %v1542 = vtanh.pop %v1541
    %1543 = vst [vmem:[#allocation2] sm:$0x3] %v1542
    %v1544 = vld [vmem:[#allocation2] sm:$0xf]
    %v1545 = vld [vmem:[#allocation8] sm:$0xff]
    %v1546 = vld [vmem:[#allocation8 + $0x8] sm:$0xff]
    %v1547 = vld [vmem:[#allocation8 + $0x10] sm:$0xff]
    %v1548 = vld [vmem:[#allocation8 + $0x18] sm:$0xff]
    %v1549 = vld [vmem:[#allocation8 + $0x20] sm:$0xff]
    %v1550 = vld [vmem:[#allocation8 + $0x28] sm:$0xff]
    %v1551 = vld [vmem:[#allocation8 + $0x30] sm:$0xff]
    %v1552 = vld [vmem:[#allocation8 + $0x38] sm:$0xff]
    %v1553 = vld [vmem:[#allocation8 + $0x40] sm:$0xff]
    %v1554 = vld [vmem:[#allocation8 + $0x48] sm:$0xff]
    %v1555 = vld [vmem:[#allocation8 + $0x50] sm:$0xff]
    %v1556 = vld [vmem:[#allocation8 + $0x58] sm:$0xff]
    %v1557 = vld [vmem:[#allocation8 + $0x60] sm:$0xff]
    %v1558 = vld [vmem:[#allocation8 + $0x68] sm:$0xff]
    %v1559 = vld [vmem:[#allocation8 + $0x70] sm:$0xff]
    %v1560 = vld [vmem:[#allocation8 + $0x78] sm:$0xff]
    %v1561 = vld [vmem:[#allocation8 + $0x80] sm:$0xff]
    %v1562 = vld [vmem:[#allocation8 + $0x88] sm:$0xff]
    %v1563 = vld [vmem:[#allocation8 + $0x90] sm:$0xff]
    %v1564 = vld [vmem:[#allocation8 + $0x98] sm:$0xff]
    %v1565 = vld [vmem:[#allocation8 + $0xa0] sm:$0xff]
    %v1566 = vld [vmem:[#allocation8 + $0xa8] sm:$0xff]
    %v1567 = vld [vmem:[#allocation8 + $0xb0] sm:$0xff]
    %v1568 = vld [vmem:[#allocation8 + $0xb8] sm:$0xff]
    %v1569 = vld [vmem:[#allocation8 + $0xc0] sm:$0xff]
    %v1570 = vld [vmem:[#allocation8 + $0xc8] sm:$0xff]
    %v1571 = vld [vmem:[#allocation8 + $0xd0] sm:$0xff]
    %v1572 = vld [vmem:[#allocation8 + $0xd8] sm:$0xff]
    %v1573 = vld [vmem:[#allocation8 + $0xe0] sm:$0xff]
    %v1574 = vld [vmem:[#allocation8 + $0xe8] sm:$0xff]
    %v1575 = vld [vmem:[#allocation8 + $0xf0] sm:$0xff]
    %v1576 = vld [vmem:[#allocation8 + $0xf8] sm:$0xff]
    %v1579 = vunpack.c.l.s4 1983009808
    %v1580 = vunpack.c.0.s8 %v1579
    %v1581 = vlaneseq
    %v1582 = vshrl.u32 %v1581, 7
    %v1583 = vsub.s32 %v1580, %v1582
    %v1584 = vrot.slane %v1544, %v1583
    %v1585 = vcombine.high %v1584, %v1584
    %1588 = vmatprep.subr.mxu0 0.0
    %1589 = vmatpush1.msra.mxu0 %v1545
    %1590 = vmatprep.subr.mxu0 0.0
    %1591 = vmatpush1.msra.mxu0 %v1546
    %1592 = vmatprep.subr.mxu0 0.0
    %1593 = vmatpush1.msra.mxu0 %v1547
    %1594 = vmatprep.subr.mxu0 0.0
    %1595 = vmatpush1.msra.mxu0 %v1548
    %1596 = vmatprep.subr.mxu0 0.0
    %1597 = vmatpush1.msra.mxu0 %v1549
    %1598 = vmatprep.subr.mxu0 0.0
    %1599 = vmatpush1.msra.mxu0 %v1550
    %1600 = vmatprep.subr.mxu0 0.0
    %1601 = vmatpush1.msra.mxu0 %v1551
    %1602 = vmatprep.subr.mxu0 0.0
    %1603 = vmatpush1.msra.mxu0 %v1552
    %1604 = vmatprep.subr.mxu0 0.0
    %1605 = vmatpush1.msra.mxu0 %v1553
    %1606 = vmatprep.subr.mxu0 0.0
    %1607 = vmatpush1.msra.mxu0 %v1554
    %1608 = vmatprep.subr.mxu0 0.0
    %1609 = vmatpush1.msra.mxu0 %v1555
    %1610 = vmatprep.subr.mxu0 0.0
    %1611 = vmatpush1.msra.mxu0 %v1556
    %1612 = vmatprep.subr.mxu0 0.0
    %1613 = vmatpush1.msra.mxu0 %v1557
    %1614 = vmatprep.subr.mxu0 0.0
    %1615 = vmatpush1.msra.mxu0 %v1558
    %1616 = vmatprep.subr.mxu0 0.0
    %1617 = vmatpush1.msra.mxu0 %v1559
    %1618 = vmatprep.subr.mxu0 0.0
    %1619 = vmatpush1.msra.mxu0 %v1560
    %1620 = vmatprep.subr.mxu0 0.0
    %1621 = vmatpush1.msra.mxu0 %v1561
    %1622 = vmatprep.subr.mxu0 0.0
    %1623 = vmatpush1.msra.mxu0 %v1562
    %1624 = vmatprep.subr.mxu0 0.0
    %1625 = vmatpush1.msra.mxu0 %v1563
    %1626 = vmatprep.subr.mxu0 0.0
    %1627 = vmatpush1.msra.mxu0 %v1564
    %1628 = vmatprep.subr.mxu0 0.0
    %1629 = vmatpush1.msra.mxu0 %v1565
    %1630 = vmatprep.subr.mxu0 0.0
    %1631 = vmatpush1.msra.mxu0 %v1566
    %1632 = vmatprep.subr.mxu0 0.0
    %1633 = vmatpush1.msra.mxu0 %v1567
    %1634 = vmatprep.subr.mxu0 0.0
    %1635 = vmatpush1.msra.mxu0 %v1568
    %1636 = vmatprep.subr.mxu0 0.0
    %1637 = vmatpush1.msra.mxu0 %v1569
    %1638 = vmatprep.subr.mxu0 0.0
    %1639 = vmatpush1.msra.mxu0 %v1570
    %1640 = vmatprep.subr.mxu0 0.0
    %1641 = vmatpush1.msra.mxu0 %v1571
    %1642 = vmatprep.subr.mxu0 0.0
    %1643 = vmatpush1.msra.mxu0 %v1572
    %1644 = vmatprep.subr.mxu0 0.0
    %1645 = vmatpush1.msra.mxu0 %v1573
    %1646 = vmatprep.subr.mxu0 0.0
    %1647 = vmatpush1.msra.mxu0 %v1574
    %1648 = vmatprep.subr.mxu0 0.0
    %1649 = vmatpush1.msra.mxu0 %v1575
    %1650 = vmatprep.subr.mxu0 0.0
    %1651 = vmatpush1.msra.mxu0 %v1576
    %1652 = vmatprep.mubr.f32.mxu0 %v1585
    %1653 = vmatmul.mubr.f32.gmra.mrb[0].mxu0 %v1584
    %v1654 = vpop.f32.mrb[0].mxu0
    %v1655 = vadd.f32 %v197, %v1654
    %v1656 = vpop.f32.mrb[0].mxu0
    %1657 = vdwg.mxu0
    %v1658 = vtanh.pop %v1655
    %1659 = vst [vmem:[#allocation2 + $0x2] sm:$0x3] %v1658
    %1660 = vst [vmem:[%s1452] sm:$0x3] %v1658
    %s1661 = scalar_lea.vmem [#allocation3], 14
    %v1662 = vld [vmem:[%s1661] sm:$0x3]
    %v1663 = vld [vmem:[#allocation2] sm:$0x3]
    %v1664 = vld [vmem:[#allocation5] sm:$0xff]
    %v1665 = vld [vmem:[#allocation5 + $0x8] sm:$0xff]
    %v1666 = vld [vmem:[#allocation5 + $0x10] sm:$0xff]
    %v1667 = vld [vmem:[#allocation5 + $0x18] sm:$0xff]
    %v1668 = vld [vmem:[#allocation5 + $0x20] sm:$0xff]
    %v1669 = vld [vmem:[#allocation5 + $0x28] sm:$0xff]
    %v1670 = vld [vmem:[#allocation5 + $0x30] sm:$0xff]
    %v1671 = vld [vmem:[#allocation5 + $0x38] sm:$0xff]
    %v1672 = vld [vmem:[#allocation5 + $0x40] sm:$0xff]
    %v1673 = vld [vmem:[#allocation5 + $0x48] sm:$0xff]
    %v1674 = vld [vmem:[#allocation5 + $0x50] sm:$0xff]
    %v1675 = vld [vmem:[#allocation5 + $0x58] sm:$0xff]
    %v1676 = vld [vmem:[#allocation5 + $0x60] sm:$0xff]
    %v1677 = vld [vmem:[#allocation5 + $0x68] sm:$0xff]
    %v1678 = vld [vmem:[#allocation5 + $0x70] sm:$0xff]
    %v1679 = vld [vmem:[#allocation5 + $0x78] sm:$0xff]
    %1680 = vmatprep.subr.mxu0 0.0
    %1681 = vmatpush1.msra.mxu0 %v1664
    %1682 = vmatprep.subr.mxu0 0.0
    %1683 = vmatpush1.msra.mxu0 %v1665
    %1684 = vmatprep.subr.mxu0 0.0
    %1685 = vmatpush1.msra.mxu0 %v1666
    %1686 = vmatprep.subr.mxu0 0.0
    %1687 = vmatpush1.msra.mxu0 %v1667
    %1688 = vmatprep.subr.mxu0 0.0
    %1689 = vmatpush1.msra.mxu0 %v1668
    %1690 = vmatprep.subr.mxu0 0.0
    %1691 = vmatpush1.msra.mxu0 %v1669
    %1692 = vmatprep.subr.mxu0 0.0
    %1693 = vmatpush1.msra.mxu0 %v1670
    %1694 = vmatprep.subr.mxu0 0.0
    %1695 = vmatpush1.msra.mxu0 %v1671
    %1696 = vmatprep.subr.mxu0 0.0
    %1697 = vmatpush1.msra.mxu0 %v1672
    %1698 = vmatprep.subr.mxu0 0.0
    %1699 = vmatpush1.msra.mxu0 %v1673
    %1700 = vmatprep.subr.mxu0 0.0
    %1701 = vmatpush1.msra.mxu0 %v1674
    %1702 = vmatprep.subr.mxu0 0.0
    %1703 = vmatpush1.msra.mxu0 %v1675
    %1704 = vmatprep.subr.mxu0 0.0
    %1705 = vmatpush1.msra.mxu0 %v1676
    %1706 = vmatprep.subr.mxu0 0.0
    %1707 = vmatpush1.msra.mxu0 %v1677
    %1708 = vmatprep.subr.mxu0 0.0
    %1709 = vmatpush1.msra.mxu0 %v1678
    %1710 = vmatprep.subr.mxu0 0.0
    %1711 = vmatpush1.msra.mxu0 %v1679
    %1712 = vmatprep.subr.mxu0 0.0
    %1713 = vmatpush1.msra.mxu0 0.0
    %1714 = vmatprep.subr.mxu0 0.0
    %1715 = vmatpush1.msra.mxu0 0.0
    %1716 = vmatprep.subr.mxu0 0.0
    %1717 = vmatpush1.msra.mxu0 0.0
    %1718 = vmatprep.subr.mxu0 0.0
    %1719 = vmatpush1.msra.mxu0 0.0
    %1720 = vmatprep.subr.mxu0 0.0
    %1721 = vmatpush1.msra.mxu0 0.0
    %1722 = vmatprep.subr.mxu0 0.0
    %1723 = vmatpush1.msra.mxu0 0.0
    %1724 = vmatprep.subr.mxu0 0.0
    %1725 = vmatpush1.msra.mxu0 0.0
    %1726 = vmatprep.subr.mxu0 0.0
    %1727 = vmatpush1.msra.mxu0 0.0
    %1728 = vmatprep.subr.mxu0 0.0
    %1729 = vmatpush1.msra.mxu0 0.0
    %1730 = vmatprep.subr.mxu0 0.0
    %1731 = vmatpush1.msra.mxu0 0.0
    %1732 = vmatprep.subr.mxu0 0.0
    %1733 = vmatpush1.msra.mxu0 0.0
    %1734 = vmatprep.subr.mxu0 0.0
    %1735 = vmatpush1.msra.mxu0 0.0
    %1736 = vmatprep.subr.mxu0 0.0
    %1737 = vmatpush1.msra.mxu0 0.0
    %1738 = vmatprep.subr.mxu0 0.0
    %1739 = vmatpush1.msra.mxu0 0.0
    %1740 = vmatprep.subr.mxu0 0.0
    %1741 = vmatpush1.msra.mxu0 0.0
    %1742 = vmatprep.subr.mxu0 0.0
    %1743 = vmatpush1.msra.mxu0 0.0
    %1744 = vmatprep.mubr.f32.mxu0 0.0
    %1745 = vmatmul.mubr.f32.gmra.mrb[0].mxu0 %v1663
    %v1746 = vpop.f32.mrb[0].mxu0
    %v1747 = vadd.f32 0.0, %v1746
    %v1748 = vpop.f32.mrb[0].mxu0
    %1749 = vdwg.mxu0
    %v1750 = vadd.f32 %v1662, %v1747
    %v1751 = vtanh.pop %v1750
    %1752 = vst [vmem:[#allocation2] sm:$0x3] %v1751
    %v1753 = vld [vmem:[#allocation2] sm:$0xf]
    %v1754 = vld [vmem:[#allocation8] sm:$0xff]
    %v1755 = vld [vmem:[#allocation8 + $0x8] sm:$0xff]
    %v1756 = vld [vmem:[#allocation8 + $0x10] sm:$0xff]
    %v1757 = vld [vmem:[#allocation8 + $0x18] sm:$0xff]
    %v1758 = vld [vmem:[#allocation8 + $0x20] sm:$0xff]
    %v1759 = vld [vmem:[#allocation8 + $0x28] sm:$0xff]
    %v1760 = vld [vmem:[#allocation8 + $0x30] sm:$0xff]
    %v1761 = vld [vmem:[#allocation8 + $0x38] sm:$0xff]
    %v1762 = vld [vmem:[#allocation8 + $0x40] sm:$0xff]
    %v1763 = vld [vmem:[#allocation8 + $0x48] sm:$0xff]
    %v1764 = vld [vmem:[#allocation8 + $0x50] sm:$0xff]
    %v1765 = vld [vmem:[#allocation8 + $0x58] sm:$0xff]
    %v1766 = vld [vmem:[#allocation8 + $0x60] sm:$0xff]
    %v1767 = vld [vmem:[#allocation8 + $0x68] sm:$0xff]
    %v1768 = vld [vmem:[#allocation8 + $0x70] sm:$0xff]
    %v1769 = vld [vmem:[#allocation8 + $0x78] sm:$0xff]
    %v1770 = vld [vmem:[#allocation8 + $0x80] sm:$0xff]
    %v1771 = vld [vmem:[#allocation8 + $0x88] sm:$0xff]
    %v1772 = vld [vmem:[#allocation8 + $0x90] sm:$0xff]
    %v1773 = vld [vmem:[#allocation8 + $0x98] sm:$0xff]
    %v1774 = vld [vmem:[#allocation8 + $0xa0] sm:$0xff]
    %v1775 = vld [vmem:[#allocation8 + $0xa8] sm:$0xff]
    %v1776 = vld [vmem:[#allocation8 + $0xb0] sm:$0xff]
    %v1777 = vld [vmem:[#allocation8 + $0xb8] sm:$0xff]
    %v1778 = vld [vmem:[#allocation8 + $0xc0] sm:$0xff]
    %v1779 = vld [vmem:[#allocation8 + $0xc8] sm:$0xff]
    %v1780 = vld [vmem:[#allocation8 + $0xd0] sm:$0xff]
    %v1781 = vld [vmem:[#allocation8 + $0xd8] sm:$0xff]
    %v1782 = vld [vmem:[#allocation8 + $0xe0] sm:$0xff]
    %v1783 = vld [vmem:[#allocation8 + $0xe8] sm:$0xff]
    %v1784 = vld [vmem:[#allocation8 + $0xf0] sm:$0xff]
    %v1785 = vld [vmem:[#allocation8 + $0xf8] sm:$0xff]
    %v1788 = vunpack.c.l.s4 1983009808
    %v1789 = vunpack.c.0.s8 %v1788
    %v1790 = vlaneseq
    %v1791 = vshrl.u32 %v1790, 7
    %v1792 = vsub.s32 %v1789, %v1791
    %v1793 = vrot.slane %v1753, %v1792
    %v1794 = vcombine.high %v1793, %v1793
    %1797 = vmatprep.subr.mxu0 0.0
    %1798 = vmatpush1.msra.mxu0 %v1754
    %1799 = vmatprep.subr.mxu0 0.0
    %1800 = vmatpush1.msra.mxu0 %v1755
    %1801 = vmatprep.subr.mxu0 0.0
    %1802 = vmatpush1.msra.mxu0 %v1756
    %1803 = vmatprep.subr.mxu0 0.0
    %1804 = vmatpush1.msra.mxu0 %v1757
    %1805 = vmatprep.subr.mxu0 0.0
    %1806 = vmatpush1.msra.mxu0 %v1758
    %1807 = vmatprep.subr.mxu0 0.0
    %1808 = vmatpush1.msra.mxu0 %v1759
    %1809 = vmatprep.subr.mxu0 0.0
    %1810 = vmatpush1.msra.mxu0 %v1760
    %1811 = vmatprep.subr.mxu0 0.0
    %1812 = vmatpush1.msra.mxu0 %v1761
    %1813 = vmatprep.subr.mxu0 0.0
    %1814 = vmatpush1.msra.mxu0 %v1762
    %1815 = vmatprep.subr.mxu0 0.0
    %1816 = vmatpush1.msra.mxu0 %v1763
    %1817 = vmatprep.subr.mxu0 0.0
    %1818 = vmatpush1.msra.mxu0 %v1764
    %1819 = vmatprep.subr.mxu0 0.0
    %1820 = vmatpush1.msra.mxu0 %v1765
    %1821 = vmatprep.subr.mxu0 0.0
    %1822 = vmatpush1.msra.mxu0 %v1766
    %1823 = vmatprep.subr.mxu0 0.0
    %1824 = vmatpush1.msra.mxu0 %v1767
    %1825 = vmatprep.subr.mxu0 0.0
    %1826 = vmatpush1.msra.mxu0 %v1768
    %1827 = vmatprep.subr.mxu0 0.0
    %1828 = vmatpush1.msra.mxu0 %v1769
    %1829 = vmatprep.subr.mxu0 0.0
    %1830 = vmatpush1.msra.mxu0 %v1770
    %1831 = vmatprep.subr.mxu0 0.0
    %1832 = vmatpush1.msra.mxu0 %v1771
    %1833 = vmatprep.subr.mxu0 0.0
    %1834 = vmatpush1.msra.mxu0 %v1772
    %1835 = vmatprep.subr.mxu0 0.0
    %1836 = vmatpush1.msra.mxu0 %v1773
    %1837 = vmatprep.subr.mxu0 0.0
    %1838 = vmatpush1.msra.mxu0 %v1774
    %1839 = vmatprep.subr.mxu0 0.0
    %1840 = vmatpush1.msra.mxu0 %v1775
    %1841 = vmatprep.subr.mxu0 0.0
    %1842 = vmatpush1.msra.mxu0 %v1776
    %1843 = vmatprep.subr.mxu0 0.0
    %1844 = vmatpush1.msra.mxu0 %v1777
    %1845 = vmatprep.subr.mxu0 0.0
    %1846 = vmatpush1.msra.mxu0 %v1778
    %1847 = vmatprep.subr.mxu0 0.0
    %1848 = vmatpush1.msra.mxu0 %v1779
    %1849 = vmatprep.subr.mxu0 0.0
    %1850 = vmatpush1.msra.mxu0 %v1780
    %1851 = vmatprep.subr.mxu0 0.0
    %1852 = vmatpush1.msra.mxu0 %v1781
    %1853 = vmatprep.subr.mxu0 0.0
    %1854 = vmatpush1.msra.mxu0 %v1782
    %1855 = vmatprep.subr.mxu0 0.0
    %1856 = vmatpush1.msra.mxu0 %v1783
    %1857 = vmatprep.subr.mxu0 0.0
    %1858 = vmatpush1.msra.mxu0 %v1784
    %1859 = vmatprep.subr.mxu0 0.0
    %1860 = vmatpush1.msra.mxu0 %v1785
    %1861 = vmatprep.mubr.f32.mxu0 %v1794
    %1862 = vmatmul.mubr.f32.gmra.mrb[0].mxu0 %v1793
    %v1863 = vpop.f32.mrb[0].mxu0
    %v1864 = vadd.f32 %v197, %v1863
    %v1865 = vpop.f32.mrb[0].mxu0
    %1866 = vdwg.mxu0
    %v1867 = vtanh.pop %v1864
    %1868 = vst [vmem:[#allocation2 + $0x2] sm:$0x3] %v1867
    %1869 = vst [vmem:[%s1661] sm:$0x3] %v1867
    %v1870 = vld [vmem:[%s6] sm:$0x1]
    %v1871 = vld [vmem:[#allocation3] sm:$0x3]
    %v1872 = vld [vmem:[#allocation3 + $0x2] sm:$0x3]
    %v1873 = vld [vmem:[#allocation3 + $0x4] sm:$0x3]
    %v1874 = vld [vmem:[#allocation3 + $0x6] sm:$0x3]
    %v1875 = vld [vmem:[#allocation3 + $0x8] sm:$0x3]
    %v1876 = vld [vmem:[#allocation3 + $0xa] sm:$0x3]
    %v1877 = vld [vmem:[#allocation3 + $0xc] sm:$0x3]
    %v1878 = vld [vmem:[#allocation3 + $0xe] sm:$0x3]
    %v1880 = vlaneseq
    %v1881 = vshrl.u32 %v1880, 7
    %v1882 = vsub.s32 0, %v1881
    %v1883 = vrot.slane %v1870, %v1882
    %v1885 = vmul.f32 %v1871, %v1883
    %v1886 = vmul.f32 %v1872, %v1883
    %v1887 = vmul.f32 %v1873, %v1883
    %v1888 = vmul.f32 %v1874, %v1883
    %v1889 = vmul.f32 %v1875, %v1883
    %v1890 = vmul.f32 %v1876, %v1883
    %v1891 = vmul.f32 %v1877, %v1883
    %v1892 = vmul.f32 %v1878, %v1883
    %vm1893 = vcmask 1041408
    %v1894 = vsel %vm1893, %v1885, 0.0
    %1895 = vadd.xlane.f32.xlu0 %v1894
    %v1896 = vpop.xlane.xlu0 %1895
    %v1897 = vsel %vm1893, %v1886, 0.0
    %1898 = vadd.xlane.f32.xlu0 %v1897
    %v1899 = vpop.xlane.xlu0 %1898
    %v1900 = vsel %vm1893, %v1887, 0.0
    %1901 = vadd.xlane.f32.xlu0 %v1900
    %v1902 = vpop.xlane.xlu0 %1901
    %v1903 = vsel %vm1893, %v1888, 0.0
    %1904 = vadd.xlane.f32.xlu0 %v1903
    %v1905 = vpop.xlane.xlu0 %1904
    %v1906 = vsel %vm1893, %v1889, 0.0
    %1907 = vadd.xlane.f32.xlu0 %v1906
    %v1908 = vpop.xlane.xlu0 %1907
    %v1909 = vsel %vm1893, %v1890, 0.0
    %1910 = vadd.xlane.f32.xlu0 %v1909
    %v1911 = vpop.xlane.xlu0 %1910
    %v1912 = vsel %vm1893, %v1891, 0.0
    %1913 = vadd.xlane.f32.xlu0 %v1912
    %v1914 = vpop.xlane.xlu0 %1913
    %v1915 = vsel %vm1893, %v1892, 0.0
    %1916 = vadd.xlane.f32.xlu0 %v1915
    %v1917 = vpop.xlane.xlu0 %1916
    %v1918 = vld [vmem:[#allocation4] sm:$0x1]
    %v1920 = vlaneseq
    %v1921 = vshrl.u32 %v1920, 7
    %v1922 = vsub.s32 0, %v1921
    %v1923 = vrot.slane %v1918, %v1922
    %1924 = vset.pattern.permute.xlu0 0
    %1925 = vperm.xlu0 %1924, %v1923
    %v1926 = vpop.permute.xlu0 %1925
    %v1928 = vadd.f32 %v1896, %v1926
    %v1929 = vadd.f32 %v1899, %v1926
    %v1930 = vadd.f32 %v1902, %v1926
    %v1931 = vadd.f32 %v1905, %v1926
    %v1932 = vadd.f32 %v1908, %v1926
    %v1933 = vadd.f32 %v1911, %v1926
    %v1934 = vadd.f32 %v1914, %v1926
    %v1935 = vadd.f32 %v1917, %v1926
    %v1944 = vlaneseq
    %v1945 = vand.u32 %v1944, 127
    %v1946 = vlaneseq
    %v1947 = vshrl.u32 %v1946, 7
    %v1948 = vsub.s32 %v1945, %v1947
    %v1949 = vrot.slane %v1928, %v1948
    %v1950 = vlaneseq
    %v1951 = vshrl.u32 %v1950, 7
    %v1952 = vsub.s32 %v1945, %v1951
    %v1953 = vrot.slane %v1929, %v1952
    %v1954 = vlaneseq
    %v1955 = vshrl.u32 %v1954, 7
    %v1956 = vsub.s32 %v1945, %v1955
    %v1957 = vrot.slane %v1930, %v1956
    %v1958 = vlaneseq
    %v1959 = vshrl.u32 %v1958, 7
    %v1960 = vsub.s32 %v1945, %v1959
    %v1961 = vrot.slane %v1931, %v1960
    %v1962 = vlaneseq
    %v1963 = vshrl.u32 %v1962, 7
    %v1964 = vsub.s32 %v1945, %v1963
    %v1965 = vrot.slane %v1932, %v1964
    %v1966 = vlaneseq
    %v1967 = vshrl.u32 %v1966, 7
    %v1968 = vsub.s32 %v1945, %v1967
    %v1969 = vrot.slane %v1933, %v1968
    %v1970 = vlaneseq
    %v1971 = vshrl.u32 %v1970, 7
    %v1972 = vsub.s32 %v1945, %v1971
    %v1973 = vrot.slane %v1934, %v1972
    %v1974 = vlaneseq
    %v1975 = vshrl.u32 %v1974, 7
    %v1976 = vsub.s32 %v1945, %v1975
    %v1977 = vrot.slane %v1935, %v1976
    %vm1978 = vcmask 1041409
    %v1979 = vsel %vm1978, %v1953, %v1949
    %vm1980 = vcmask 1042434
    %v1981 = vsel %vm1980, %v1957, %v1979
    %vm1982 = vcmask 1043459
    %v1983 = vsel %vm1982, %v1961, %v1981
    %vm1984 = vcmask 1044484
    %v1985 = vsel %vm1984, %v1965, %v1983
    %vm1986 = vcmask 1045509
    %v1987 = vsel %vm1986, %v1969, %v1985
    %vm1988 = vcmask 1046534
    %v1989 = vsel %vm1988, %v1973, %v1987
    %vm1990 = vcmask 1047559
    %v1991 = vsel %vm1990, %v1977, %v1989
    %1993 = vxpose.xlu0.b32.start [1/16] %v1991, 128
    %1994 = vxpose.xlu0.b32.cont [2/16] 0.0, 128
    %1995 = vxpose.xlu0.b32.cont [3/16] 0.0, 128
    %1996 = vxpose.xlu0.b32.cont [4/16] 0.0, 128
    %1997 = vxpose.xlu0.b32.cont [5/16] 0.0, 128
    %1998 = vxpose.xlu0.b32.cont [6/16] 0.0, 128
    %1999 = vxpose.xlu0.b32.cont [7/16] 0.0, 128
    %2000 = vxpose.xlu0.b32.cont [8/16] 0.0, 128
    %2001 = vxpose.xlu0.b32.cont [9/16] 0.0, 128
    %2002 = vxpose.xlu0.b32.cont [10/16] 0.0, 128
    %2003 = vxpose.xlu0.b32.cont [11/16] 0.0, 128
    %2004 = vxpose.xlu0.b32.cont [12/16] 0.0, 128
    %2005 = vxpose.xlu0.b32.cont [13/16] 0.0, 128
    %2006 = vxpose.xlu0.b32.cont [14/16] 0.0, 128
    %2007 = vxpose.xlu0.b32.cont [15/16] 0.0, 128
    %2008 = vxpose.xlu0.b32.end [16/16] 0.0, 128
    %v2009 = vpop.trf.xlu0
    %v2010 = vpop.trf.xlu0
    %v2011 = vpop.trf.xlu0
    %v2012 = vpop.trf.xlu0
    %v2013 = vpop.trf.xlu0
    %v2014 = vpop.trf.xlu0
    %v2015 = vpop.trf.xlu0
    %v2016 = vpop.trf.xlu0
    %v2017 = vpop.trf.xlu0
    %v2018 = vpop.trf.xlu0
    %v2019 = vpop.trf.xlu0
    %v2020 = vpop.trf.xlu0
    %v2021 = vpop.trf.xlu0
    %v2022 = vpop.trf.xlu0
    %v2023 = vpop.trf.xlu0
    %v2024 = vpop.trf.xlu0
    %vm2025 = vcmask 58368
    %2026 = vst.msk [vmem:[#allocation10] sm:$0x3] %vm2025, %v2009
    // Predicated region
    $region46: #{tpu_custom_call.1} parent=1 // pred_check
      _
    $region47: #{tpu_custom_call.1} parent=1 // pred_check_branch
      %2028 = sbr.rel (0) target = $region49
    $region48: #{tpu_custom_call.1} parent=1 // pred_region
      %s2030 = ssub.s32 32, 32
      %2031 = vsyncadd [#allocation7], %s2030
      %s2033 = sshll.u32 [#allocation10], 4
      %s2034 = int_to_ptr.vmem [resolvable:$true] %s2033
      %2036 = dma.vmem_to_hbm [thread:$0]  %s2034, 32, %s8, [#allocation7]
    $region49: #{tpu_custom_call.1} parent=1 // pred_fallthru
      _
    // Predicated region
    $region50: #{tpu_custom_call.1} parent=1 // pred_check
      _
    $region51: #{tpu_custom_call.1} parent=1 // pred_check_branch
      %2038 = sbr.rel (0) target = $region53
    $region52: #{tpu_custom_call.1} parent=1 // pred_region
      %2039 = dma.done [#allocation7], 32
    $region53: #{tpu_custom_call.1} parent=1 // pred_fallthru
      _
    %2040 = vsyncpa [#allocation6], 1
    %2041 = vsyncpa [#allocation9], 1
    %2042 = vsyncpa [#allocation7], 1

</llo_original>
